<compile_context>
chip_gen: v5e
topology: v5e:2x2
jax: 0.10.0
libtpu: 0.0.40
codegen_flags: <defaults>
</compile_context>

<pallas_src>
import jax
import jax.numpy as jnp
from jax import lax
from jax.experimental import pallas as pl
from jax.experimental.pallas import tpu as pltpu

# ----------------------------- config ---------------------------------------
B = 2            # batch
S = 8            # sequence length
H = 32           # hidden size
NH = 4           # attention heads
DH = H // NH     # head dim
INTER = 64       # FFN intermediate size
LAYERS = 2       # encoder layers
VOCAB = 100
MAX_POS = 64
TYPE_VOCAB = 2
N_CLASS = 1      # classifier implemented as VPU reduce; assumes N_CLASS == 1
LN_EPS = 1e-12
ATTN_SCALE = 1.0 / float(DH) ** 0.5

assert N_CLASS == 1


# ----------------------------- in-kernel helpers -----------------------------
def _layernorm(x, g, b):
    mu = jnp.mean(x, axis=-1, keepdims=True)
    xc = x - mu
    var = jnp.mean(xc * xc, axis=-1, keepdims=True)
    return xc * lax.rsqrt(var + LN_EPS) * g + b


def _gelu(y):
    # TODO(synk): BERT reference uses erf-GELU; tanh approximation used here.
    return 0.5 * y * (1.0 + jnp.tanh(0.7978845608028654 * (y + 0.044715 * y * y * y)))


# ----------------------------- fused Pallas kernel ---------------------------
def _bert_kernel(emb_ref, mask_ref, misc_ref,
                 wqkv_ref, bqkv_ref, wo_ref, vec_ref, wi_ref, bi_ref, wf_ref,
                 pool_w_ref,
                 hidden_ref, logits_ref):
    # misc rows: 0=emb_ln_g, 1=emb_ln_b, 2=pool_b, 3=clf_w row, 4=clf_b (padded)
    misc = misc_ref[...]                                                    # [5, H]

    # --- embedding LayerNorm ---
    h = _layernorm(emb_ref[...], misc[0:1, :], misc[1:2, :])                # [B*S, H]

    # --- additive attention mask built in-kernel from the raw [B, 1, S] mask ---
    mask_bias = (1.0 - mask_ref[...]) * -10000.0                            # [B, 1, S]

    # --- encoder layers (weights stacked along leading LAYERS axis) ---
    for l in range(LAYERS):
        x = h                                                               # [B*S, H]
        vec = vec_ref[l]       # rows: 0=bo, 1=ln1_g, 2=ln1_b, 3=bf, 4=ln2_g, 5=ln2_b
        wo_l = wo_ref[l]                                                    # [NH, DH, H]

        # fused QKV projection: one [H, 3H] matmul
        qkv = (jnp.dot(x, wqkv_ref[l], preferred_element_type=jnp.float32)
               + bqkv_ref[l])                                               # [B*S, 3H]
        q3 = qkv[:, 0:H].reshape(B, S, H)
        k3 = qkv[:, H:2 * H].reshape(B, S, H)
        v3 = qkv[:, 2 * H:3 * H].reshape(B, S, H)

        # attention: batched over B via 3-D einsums, head loop unrolled; head
        # outputs are folded directly into the output projection (no concat).
        attn = None
        for hd in range(NH):
            c0 = hd * DH
            qh = q3[:, :, c0:c0 + DH]                                       # [B, S, DH]
            kh = k3[:, :, c0:c0 + DH]
            vh = v3[:, :, c0:c0 + DH]

            s = jnp.einsum('bqd,bkd->bqk', qh, kh,
                           preferred_element_type=jnp.float32) * ATTN_SCALE
            s = s + mask_bias                                               # [B, S, S]
            s = s - jnp.max(s, axis=-1, keepdims=True)
            p = jnp.exp(s)
            p = p * pl.reciprocal(jnp.sum(p, axis=-1, keepdims=True), approx=True)

            ctx = jnp.einsum('bqk,bkd->bqd', p, vh,
                             preferred_element_type=jnp.float32)            # [B, S, DH]
            term = jnp.dot(ctx.reshape(B * S, DH), wo_l[hd],
                           preferred_element_type=jnp.float32)              # [B*S, H]
            attn = term if attn is None else attn + term

        # output-projection bias + fused residual + LayerNorm
        attn_out = attn + vec[0:1, :]
        h1 = _layernorm(attn_out + x, vec[1:2, :], vec[2:3, :])

        # FFN + fused residual + LayerNorm
        inter = _gelu(jnp.dot(h1, wi_ref[l], preferred_element_type=jnp.float32)
                      + bi_ref[l])
        ffn = (jnp.dot(inter, wf_ref[l], preferred_element_type=jnp.float32)
               + vec[3:4, :])
        h = _layernorm(ffn + h1, vec[4:5, :], vec[5:6, :])

    hidden_ref[...] = h

    # --- pooler (tanh linear on CLS token) ---
    cls = h.reshape(B, S, H)[:, 0:1, :].reshape(B, H)                       # [B, H]
    pooled = jnp.tanh(
        jnp.dot(cls, pool_w_ref[...], preferred_element_type=jnp.float32)
        + misc[2:3, :])                                                     # [B, H]

    # --- classification head: VPU broadcast-mul + lane reduce (N_CLASS == 1) ---
    # dropout on pooled output is identity in eval mode
    logits_ref[...] = (jnp.sum(pooled * misc[3:4, :], axis=-1, keepdims=True)
                       + misc[4:5, 0:1])                                    # [B, 1]


# ----------------------------- parameter init --------------------------------
def init_params(key):
    p = {}
    ks = iter(jax.random.split(key, 64))

    def nrm(shape):
        return (jax.random.normal(next(ks), shape, jnp.float32) * 0.02).astype(jnp.float32)

    p["word_emb"] = nrm((VOCAB, H))
    p["pos_emb"] = nrm((MAX_POS, H))
    p["type_emb"] = nrm((TYPE_VOCAB, H))
    p["emb_ln_g"] = jnp.ones((H,), jnp.float32)
    p["emb_ln_b"] = jnp.zeros((H,), jnp.float32)

    p["layers"] = []
    for _ in range(LAYERS):
        lyr = {
            "wq": nrm((H, H)), "bq": jnp.zeros((H,), jnp.float32),
            "wk": nrm((H, H)), "bk": jnp.zeros((H,), jnp.float32),
            "wv": nrm((H, H)), "bv": jnp.zeros((H,), jnp.float32),
            "wo": nrm((H, H)), "bo": jnp.zeros((H,), jnp.float32),
            "ln1_g": jnp.ones((H,), jnp.float32), "ln1_b": jnp.zeros((H,), jnp.float32),
            "wi": nrm((H, INTER)), "bi": jnp.zeros((INTER,), jnp.float32),
            "wf": nrm((INTER, H)), "bf": jnp.zeros((H,), jnp.float32),
            "ln2_g": jnp.ones((H,), jnp.float32), "ln2_b": jnp.zeros((H,), jnp.float32),
        }
        p["layers"].append(lyr)

    p["pool_w"] = nrm((H, H))
    p["pool_b"] = jnp.zeros((H,), jnp.float32)

    # classification head: xavier_uniform_ weight, zero bias (as in __init__)
    limit = (6.0 / (H + N_CLASS)) ** 0.5
    p["clf_w"] = jax.random.uniform(next(ks), (H, N_CLASS), jnp.float32, -limit, limit)
    p["clf_b"] = jnp.zeros((N_CLASS,), jnp.float32)
    return p


# ----------------------------- forward ---------------------------------------
def bert_classification_head_forward(params, input_ids, attention_mask, token_type_ids):
    """Returns (hidden_states [B,S,H], logits [B, N_CLASS])."""
    Bc, Sc = input_ids.shape
    positions = jnp.arange(Sc, dtype=jnp.int32)[None, :]

    # embeddings (gather glue in plain JAX)
    emb = (params["word_emb"][input_ids]
           + params["pos_emb"][positions]
           + params["type_emb"][token_type_ids]).reshape(Bc * Sc, H).astype(jnp.float32)
    mask3 = attention_mask.astype(jnp.float32)[:, None, :]                  # [B, 1, S]

    # pack per-layer weights: QKV fused, per-head Wo slabs, small vectors coalesced
    layers = params["layers"]
    wqkv = jnp.stack([jnp.concatenate([l["wq"], l["wk"], l["wv"]], axis=1) for l in layers])
    bqkv = jnp.stack([jnp.concatenate([l["bq"], l["bk"], l["bv"]])[None, :] for l in layers])
    wo_heads = jnp.stack([l["wo"].reshape(NH, DH, H) for l in layers])      # [L,NH,DH,H]
    vec_h = jnp.stack([jnp.stack([l["bo"], l["ln1_g"], l["ln1_b"],
                                  l["bf"], l["ln2_g"], l["ln2_b"]]) for l in layers])
    wi = jnp.stack([l["wi"] for l in layers])
    bi = jnp.stack([l["bi"][None, :] for l in layers])
    wf = jnp.stack([l["wf"] for l in layers])

    # misc slab: emb_ln_g, emb_ln_b, pool_b, classifier weight row, classifier bias
    clf_b_row = jnp.zeros((H,), jnp.float32).at[:N_CLASS].set(params["clf_b"])
    misc = jnp.stack([params["emb_ln_g"], params["emb_ln_b"], params["pool_b"],
                      params["clf_w"][:, 0], clf_b_row])                    # [5, H]

    inputs = (emb, mask3, misc,
              wqkv, bqkv, wo_heads, vec_h, wi, bi, wf,
              params["pool_w"])

    vmem_spec = pl.BlockSpec(memory_space=pltpu.MemorySpace.VMEM)
    hidden, logits = pl.pallas_call(
        _bert_kernel,
        out_shape=(jax.ShapeDtypeStruct((Bc * Sc, H), jnp.float32),
                   jax.ShapeDtypeStruct((Bc, N_CLASS), jnp.float32)),
        in_specs=[vmem_spec] * len(inputs),
        out_specs=(vmem_spec, vmem_spec),
    )(*inputs)

    return hidden.reshape(Bc, Sc, H), logits


# ----------------------------- main ------------------------------------------
if __name__ == "__main__":
    key = jax.random.PRNGKey(0)
    k_param, k_ids, k_types = jax.random.split(key, 3)

    params = init_params(k_param)
    input_ids = jax.random.randint(k_ids, (B, S), 0, VOCAB, dtype=jnp.int32)
    attention_mask = jnp.ones((B, S), jnp.int32)
    token_type_ids = jnp.zeros((B, S), jnp.int32)

    hidden_states, logits = bert_classification_head_forward(
        params, input_ids, attention_mask, token_type_ids)
    jax.block_until_ready(logits)

    assert hidden_states.shape == (B, S, H)
    assert logits.shape == (B, N_CLASS)
    assert bool(jnp.all(jnp.isfinite(hidden_states)))
    assert bool(jnp.all(jnp.isfinite(logits)))
    print("KERNEL_OK")
</pallas_src>

<mosaic_0001>
module attributes {stable_mosaic.version = 11 : i64} {
  func.func @_bert_kernel(%arg0: memref<16x32xf32, #tpu.memory_space<vmem>>, %arg1: memref<2x1x8xf32, #tpu.memory_space<vmem>>, %arg2: memref<5x32xf32, #tpu.memory_space<vmem>>, %arg3: memref<2x32x96xf32, #tpu.memory_space<vmem>>, %arg4: memref<2x1x96xf32, #tpu.memory_space<vmem>>, %arg5: memref<2x4x8x32xf32, #tpu.memory_space<vmem>>, %arg6: memref<2x6x32xf32, #tpu.memory_space<vmem>>, %arg7: memref<2x32x64xf32, #tpu.memory_space<vmem>>, %arg8: memref<2x1x64xf32, #tpu.memory_space<vmem>>, %arg9: memref<2x64x32xf32, #tpu.memory_space<vmem>>, %arg10: memref<32x32xf32, #tpu.memory_space<vmem>>, %arg11: memref<16x32xf32, #tpu.memory_space<vmem>>, %arg12: memref<2x1xf32, #tpu.memory_space<vmem>>) attributes {dimension_semantics = [], scalar_prefetch = 0 : i64, scratch_operands = 0 : i64, tpu.core_type = #tpu.core_type<tc>} {
    %c0 = arith.constant 0 : index
    %c0_0 = arith.constant 0 : index
    %0 = vector.load %arg2[%c0, %c0_0] : memref<5x32xf32, #tpu.memory_space<vmem>>, vector<5x32xf32>
    %c0_1 = arith.constant 0 : index
    %c0_2 = arith.constant 0 : index
    %1 = vector.load %arg0[%c0_1, %c0_2] : memref<16x32xf32, #tpu.memory_space<vmem>>, vector<16x32xf32>
    %2 = vector.extract_strided_slice %0 {offsets = [0, 0], sizes = [1, 32], strides = [1, 1]} : vector<5x32xf32> to vector<1x32xf32>
    %3 = vector.extract_strided_slice %0 {offsets = [1, 0], sizes = [1, 32], strides = [1, 1]} : vector<5x32xf32> to vector<1x32xf32>
    %cst = arith.constant dense<0.000000e+00> : vector<16xf32>
    %4 = vector.multi_reduction <add>, %1, %cst [1] : vector<16x32xf32> to vector<16xf32>
    %5 = vector.shape_cast %4 : vector<16xf32> to vector<16x1xf32>
    %cst_3 = arith.constant 3.200000e+01 : f32
    %6 = vector.broadcast %cst_3 : f32 to vector<16x1xf32>
    %7 = arith.divf %5, %6 : vector<16x1xf32>
    %8 = vector.broadcast %7 : vector<16x1xf32> to vector<16x32xf32>
    %9 = arith.subf %1, %8 : vector<16x32xf32>
    %10 = arith.mulf %9, %9 : vector<16x32xf32>
    %cst_4 = arith.constant dense<0.000000e+00> : vector<16xf32>
    %11 = vector.multi_reduction <add>, %10, %cst_4 [1] : vector<16x32xf32> to vector<16xf32>
    %12 = vector.shape_cast %11 : vector<16xf32> to vector<16x1xf32>
    %cst_5 = arith.constant 3.200000e+01 : f32
    %13 = vector.broadcast %cst_5 : f32 to vector<16x1xf32>
    %14 = arith.divf %12, %13 : vector<16x1xf32>
    %cst_6 = arith.constant 9.99999996E-13 : f32
    %15 = vector.broadcast %cst_6 : f32 to vector<16x1xf32>
    %16 = arith.addf %14, %15 : vector<16x1xf32>
    %17 = math.rsqrt %16 : vector<16x1xf32>
    %18 = vector.broadcast %17 : vector<16x1xf32> to vector<16x32xf32>
    %19 = arith.mulf %9, %18 : vector<16x32xf32>
    %20 = vector.broadcast %2 : vector<1x32xf32> to vector<16x32xf32>
    %21 = arith.mulf %19, %20 : vector<16x32xf32>
    %22 = vector.broadcast %3 : vector<1x32xf32> to vector<16x32xf32>
    %23 = arith.addf %21, %22 : vector<16x32xf32>
    %c0_7 = arith.constant 0 : index
    %c0_8 = arith.constant 0 : index
    %c0_9 = arith.constant 0 : index
    %24 = vector.load %arg1[%c0_7, %c0_8, %c0_9] : memref<2x1x8xf32, #tpu.memory_space<vmem>>, vector<2x1x8xf32>
    %cst_10 = arith.constant 1.000000e+00 : f32
    %25 = vector.broadcast %cst_10 : f32 to vector<2x1x8xf32>
    %26 = arith.subf %25, %24 : vector<2x1x8xf32>
    %cst_11 = arith.constant -1.000000e+04 : f32
    %27 = vector.broadcast %cst_11 : f32 to vector<2x1x8xf32>
    %28 = arith.mulf %26, %27 : vector<2x1x8xf32>
    %c0_12 = arith.constant 0 : index
    %c0_13 = arith.constant 0 : index
    %c0_14 = arith.constant 0 : index
    %29 = vector.load %arg6[%c0_12, %c0_13, %c0_14] : memref<2x6x32xf32, #tpu.memory_space<vmem>>, vector<1x6x32xf32>
    %30 = vector.shape_cast %29 : vector<1x6x32xf32> to vector<6x32xf32>
    %c0_15 = arith.constant 0 : index
    %c0_16 = arith.constant 0 : index
    %c0_17 = arith.constant 0 : index
    %c0_18 = arith.constant 0 : index
    %31 = vector.load %arg5[%c0_15, %c0_16, %c0_17, %c0_18] : memref<2x4x8x32xf32, #tpu.memory_space<vmem>>, vector<1x4x8x32xf32>
    %32 = vector.shape_cast %31 : vector<1x4x8x32xf32> to vector<4x8x32xf32>
    %c0_19 = arith.constant 0 : index
    %c0_20 = arith.constant 0 : index
    %c0_21 = arith.constant 0 : index
    %33 = vector.load %arg3[%c0_19, %c0_20, %c0_21] : memref<2x32x96xf32, #tpu.memory_space<vmem>>, vector<1x32x96xf32>
    %34 = vector.shape_cast %33 : vector<1x32x96xf32> to vector<32x96xf32>
    %cst_22 = arith.constant dense<0.000000e+00> : vector<16x96xf32>
    %35 = tpu.matmul %23, %34, %cst_22 {dimension_numbers = #tpu.dot_dimension_numbers<[1], [0], [0], [1], [0, 0, 1, 1], [], []>} : vector<16x32xf32>, vector<32x96xf32>, vector<16x96xf32> -> vector<16x96xf32>
    %c0_23 = arith.constant 0 : index
    %c0_24 = arith.constant 0 : index
    %c0_25 = arith.constant 0 : index
    %36 = vector.load %arg4[%c0_23, %c0_24, %c0_25] : memref<2x1x96xf32, #tpu.memory_space<vmem>>, vector<1x1x96xf32>
    %37 = vector.shape_cast %36 : vector<1x1x96xf32> to vector<1x96xf32>
    %38 = vector.broadcast %37 : vector<1x96xf32> to vector<16x96xf32>
    %39 = arith.addf %35, %38 : vector<16x96xf32>
    %40 = vector.extract_strided_slice %39 {offsets = [0, 0], sizes = [16, 32], strides = [1, 1]} : vector<16x96xf32> to vector<16x32xf32>
    %41 = vector.shape_cast %40 : vector<16x32xf32> to vector<2x8x32xf32>
    %42 = vector.extract_strided_slice %39 {offsets = [0, 32], sizes = [16, 32], strides = [1, 1]} : vector<16x96xf32> to vector<16x32xf32>
    %43 = vector.shape_cast %42 : vector<16x32xf32> to vector<2x8x32xf32>
    %44 = vector.extract_strided_slice %39 {offsets = [0, 64], sizes = [16, 32], strides = [1, 1]} : vector<16x96xf32> to vector<16x32xf32>
    %45 = vector.shape_cast %44 : vector<16x32xf32> to vector<2x8x32xf32>
    %46 = vector.extract_strided_slice %41 {offsets = [0, 0, 0], sizes = [2, 8, 8], strides = [1, 1, 1]} : vector<2x8x32xf32> to vector<2x8x8xf32>
    %47 = vector.extract_strided_slice %43 {offsets = [0, 0, 0], sizes = [2, 8, 8], strides = [1, 1, 1]} : vector<2x8x32xf32> to vector<2x8x8xf32>
    %48 = vector.extract_strided_slice %45 {offsets = [0, 0, 0], sizes = [2, 8, 8], strides = [1, 1, 1]} : vector<2x8x32xf32> to vector<2x8x8xf32>
    "tpu.trace_start"() <{level = 10 : i32, message = "bqd,bkd->bqk"}> : () -> ()
    %cst_26 = arith.constant dense<0.000000e+00> : vector<2x8x8xf32>
    %49 = tpu.matmul %46, %47, %cst_26 {dimension_numbers = #tpu.dot_dimension_numbers<[2], [2], [1], [1], [0, 0, 0, 1, 1, 1], [0], [0]>} : vector<2x8x8xf32>, vector<2x8x8xf32>, vector<2x8x8xf32> -> vector<2x8x8xf32>
    "tpu.trace_stop"() : () -> ()
    %cst_27 = arith.constant 0.353553385 : f32
    %50 = vector.broadcast %cst_27 : f32 to vector<2x8x8xf32>
    %51 = arith.mulf %49, %50 : vector<2x8x8xf32>
    %52 = vector.broadcast %28 : vector<2x1x8xf32> to vector<2x8x8xf32>
    %53 = arith.addf %51, %52 : vector<2x8x8xf32>
    %cst_28 = arith.constant dense<0xFF800000> : vector<2x8xf32>
    %54 = vector.multi_reduction <maximumf>, %53, %cst_28 [2] : vector<2x8x8xf32> to vector<2x8xf32>
    %55 = vector.shape_cast %54 : vector<2x8xf32> to vector<2x8x1xf32>
    %56 = vector.broadcast %55 : vector<2x8x1xf32> to vector<2x8x8xf32>
    %57 = arith.subf %53, %56 : vector<2x8x8xf32>
    %58 = math.exp %57 : vector<2x8x8xf32>
    %cst_29 = arith.constant dense<0.000000e+00> : vector<2x8xf32>
    %59 = vector.multi_reduction <add>, %58, %cst_29 [2] : vector<2x8x8xf32> to vector<2x8xf32>
    %60 = vector.shape_cast %59 : vector<2x8xf32> to vector<2x8x1xf32>
    %61 = tpu.reciprocal %60 {approx = true} : vector<2x8x1xf32> -> vector<2x8x1xf32>
    %62 = vector.broadcast %61 : vector<2x8x1xf32> to vector<2x8x8xf32>
    %63 = arith.mulf %58, %62 : vector<2x8x8xf32>
    "tpu.trace_start"() <{level = 10 : i32, message = "bqk,bkd->bqd"}> : () -> ()
    %cst_30 = arith.constant dense<0.000000e+00> : vector<2x8x8xf32>
    %64 = tpu.matmul %63, %48, %cst_30 {dimension_numbers = #tpu.dot_dimension_numbers<[2], [1], [1], [2], [0, 0, 0, 1, 1, 2], [0], [0]>} : vector<2x8x8xf32>, vector<2x8x8xf32>, vector<2x8x8xf32> -> vector<2x8x8xf32>
    "tpu.trace_stop"() : () -> ()
    %65 = vector.shape_cast %64 : vector<2x8x8xf32> to vector<16x8xf32>
    %66 = vector.extract_strided_slice %32 {offsets = [0, 0, 0], sizes = [1, 8, 32], strides = [1, 1, 1]} : vector<4x8x32xf32> to vector<1x8x32xf32>
    %67 = vector.shape_cast %66 : vector<1x8x32xf32> to vector<8x32xf32>
    %cst_31 = arith.constant dense<0.000000e+00> : vector<16x32xf32>
    %68 = tpu.matmul %65, %67, %cst_31 {dimension_numbers = #tpu.dot_dimension_numbers<[1], [0], [0], [1], [0, 0, 1, 1], [], []>} : vector<16x8xf32>, vector<8x32xf32>, vector<16x32xf32> -> vector<16x32xf32>
    %69 = vector.extract_strided_slice %41 {offsets = [0, 0, 8], sizes = [2, 8, 8], strides = [1, 1, 1]} : vector<2x8x32xf32> to vector<2x8x8xf32>
    %70 = vector.extract_strided_slice %43 {offsets = [0, 0, 8], sizes = [2, 8, 8], strides = [1, 1, 1]} : vector<2x8x32xf32> to vector<2x8x8xf32>
    %71 = vector.extract_strided_slice %45 {offsets = [0, 0, 8], sizes = [2, 8, 8], strides = [1, 1, 1]} : vector<2x8x32xf32> to vector<2x8x8xf32>
    "tpu.trace_start"() <{level = 10 : i32, message = "bqd,bkd->bqk"}> : () -> ()
    %cst_32 = arith.constant dense<0.000000e+00> : vector<2x8x8xf32>
    %72 = tpu.matmul %69, %70, %cst_32 {dimension_numbers = #tpu.dot_dimension_numbers<[2], [2], [1], [1], [0, 0, 0, 1, 1, 1], [0], [0]>} : vector<2x8x8xf32>, vector<2x8x8xf32>, vector<2x8x8xf32> -> vector<2x8x8xf32>
    "tpu.trace_stop"() : () -> ()
    %cst_33 = arith.constant 0.353553385 : f32
    %73 = vector.broadcast %cst_33 : f32 to vector<2x8x8xf32>
    %74 = arith.mulf %72, %73 : vector<2x8x8xf32>
    %75 = vector.broadcast %28 : vector<2x1x8xf32> to vector<2x8x8xf32>
    %76 = arith.addf %74, %75 : vector<2x8x8xf32>
    %cst_34 = arith.constant dense<0xFF800000> : vector<2x8xf32>
    %77 = vector.multi_reduction <maximumf>, %76, %cst_34 [2] : vector<2x8x8xf32> to vector<2x8xf32>
    %78 = vector.shape_cast %77 : vector<2x8xf32> to vector<2x8x1xf32>
    %79 = vector.broadcast %78 : vector<2x8x1xf32> to vector<2x8x8xf32>
    %80 = arith.subf %76, %79 : vector<2x8x8xf32>
    %81 = math.exp %80 : vector<2x8x8xf32>
    %cst_35 = arith.constant dense<0.000000e+00> : vector<2x8xf32>
    %82 = vector.multi_reduction <add>, %81, %cst_35 [2] : vector<2x8x8xf32> to vector<2x8xf32>
    %83 = vector.shape_cast %82 : vector<2x8xf32> to vector<2x8x1xf32>
    %84 = tpu.reciprocal %83 {approx = true} : vector<2x8x1xf32> -> vector<2x8x1xf32>
    %85 = vector.broadcast %84 : vector<2x8x1xf32> to vector<2x8x8xf32>
    %86 = arith.mulf %81, %85 : vector<2x8x8xf32>
    "tpu.trace_start"() <{level = 10 : i32, message = "bqk,bkd->bqd"}> : () -> ()
    %cst_36 = arith.constant dense<0.000000e+00> : vector<2x8x8xf32>
    %87 = tpu.matmul %86, %71, %cst_36 {dimension_numbers = #tpu.dot_dimension_numbers<[2], [1], [1], [2], [0, 0, 0, 1, 1, 2], [0], [0]>} : vector<2x8x8xf32>, vector<2x8x8xf32>, vector<2x8x8xf32> -> vector<2x8x8xf32>
    "tpu.trace_stop"() : () -> ()
    %88 = vector.shape_cast %87 : vector<2x8x8xf32> to vector<16x8xf32>
    %89 = vector.extract_strided_slice %32 {offsets = [1, 0, 0], sizes = [1, 8, 32], strides = [1, 1, 1]} : vector<4x8x32xf32> to vector<1x8x32xf32>
    %90 = vector.shape_cast %89 : vector<1x8x32xf32> to vector<8x32xf32>
    %cst_37 = arith.constant dense<0.000000e+00> : vector<16x32xf32>
    %91 = tpu.matmul %88, %90, %cst_37 {dimension_numbers = #tpu.dot_dimension_numbers<[1], [0], [0], [1], [0, 0, 1, 1], [], []>} : vector<16x8xf32>, vector<8x32xf32>, vector<16x32xf32> -> vector<16x32xf32>
    %92 = arith.addf %68, %91 : vector<16x32xf32>
    %93 = vector.extract_strided_slice %41 {offsets = [0, 0, 16], sizes = [2, 8, 8], strides = [1, 1, 1]} : vector<2x8x32xf32> to vector<2x8x8xf32>
    %94 = vector.extract_strided_slice %43 {offsets = [0, 0, 16], sizes = [2, 8, 8], strides = [1, 1, 1]} : vector<2x8x32xf32> to vector<2x8x8xf32>
    %95 = vector.extract_strided_slice %45 {offsets = [0, 0, 16], sizes = [2, 8, 8], strides = [1, 1, 1]} : vector<2x8x32xf32> to vector<2x8x8xf32>
    "tpu.trace_start"() <{level = 10 : i32, message = "bqd,bkd->bqk"}> : () -> ()
    %cst_38 = arith.constant dense<0.000000e+00> : vector<2x8x8xf32>
    %96 = tpu.matmul %93, %94, %cst_38 {dimension_numbers = #tpu.dot_dimension_numbers<[2], [2], [1], [1], [0, 0, 0, 1, 1, 1], [0], [0]>} : vector<2x8x8xf32>, vector<2x8x8xf32>, vector<2x8x8xf32> -> vector<2x8x8xf32>
    "tpu.trace_stop"() : () -> ()
    %cst_39 = arith.constant 0.353553385 : f32
    %97 = vector.broadcast %cst_39 : f32 to vector<2x8x8xf32>
    %98 = arith.mulf %96, %97 : vector<2x8x8xf32>
    %99 = vector.broadcast %28 : vector<2x1x8xf32> to vector<2x8x8xf32>
    %100 = arith.addf %98, %99 : vector<2x8x8xf32>
    %cst_40 = arith.constant dense<0xFF800000> : vector<2x8xf32>
    %101 = vector.multi_reduction <maximumf>, %100, %cst_40 [2] : vector<2x8x8xf32> to vector<2x8xf32>
    %102 = vector.shape_cast %101 : vector<2x8xf32> to vector<2x8x1xf32>
    %103 = vector.broadcast %102 : vector<2x8x1xf32> to vector<2x8x8xf32>
    %104 = arith.subf %100, %103 : vector<2x8x8xf32>
    %105 = math.exp %104 : vector<2x8x8xf32>
    %cst_41 = arith.constant dense<0.000000e+00> : vector<2x8xf32>
    %106 = vector.multi_reduction <add>, %105, %cst_41 [2] : vector<2x8x8xf32> to vector<2x8xf32>
    %107 = vector.shape_cast %106 : vector<2x8xf32> to vector<2x8x1xf32>
    %108 = tpu.reciprocal %107 {approx = true} : vector<2x8x1xf32> -> vector<2x8x1xf32>
    %109 = vector.broadcast %108 : vector<2x8x1xf32> to vector<2x8x8xf32>
    %110 = arith.mulf %105, %109 : vector<2x8x8xf32>
    "tpu.trace_start"() <{level = 10 : i32, message = "bqk,bkd->bqd"}> : () -> ()
    %cst_42 = arith.constant dense<0.000000e+00> : vector<2x8x8xf32>
    %111 = tpu.matmul %110, %95, %cst_42 {dimension_numbers = #tpu.dot_dimension_numbers<[2], [1], [1], [2], [0, 0, 0, 1, 1, 2], [0], [0]>} : vector<2x8x8xf32>, vector<2x8x8xf32>, vector<2x8x8xf32> -> vector<2x8x8xf32>
    "tpu.trace_stop"() : () -> ()
    %112 = vector.shape_cast %111 : vector<2x8x8xf32> to vector<16x8xf32>
    %113 = vector.extract_strided_slice %32 {offsets = [2, 0, 0], sizes = [1, 8, 32], strides = [1, 1, 1]} : vector<4x8x32xf32> to vector<1x8x32xf32>
    %114 = vector.shape_cast %113 : vector<1x8x32xf32> to vector<8x32xf32>
    %cst_43 = arith.constant dense<0.000000e+00> : vector<16x32xf32>
    %115 = tpu.matmul %112, %114, %cst_43 {dimension_numbers = #tpu.dot_dimension_numbers<[1], [0], [0], [1], [0, 0, 1, 1], [], []>} : vector<16x8xf32>, vector<8x32xf32>, vector<16x32xf32> -> vector<16x32xf32>
    %116 = arith.addf %92, %115 : vector<16x32xf32>
    %117 = vector.extract_strided_slice %41 {offsets = [0, 0, 24], sizes = [2, 8, 8], strides = [1, 1, 1]} : vector<2x8x32xf32> to vector<2x8x8xf32>
    %118 = vector.extract_strided_slice %43 {offsets = [0, 0, 24], sizes = [2, 8, 8], strides = [1, 1, 1]} : vector<2x8x32xf32> to vector<2x8x8xf32>
    %119 = vector.extract_strided_slice %45 {offsets = [0, 0, 24], sizes = [2, 8, 8], strides = [1, 1, 1]} : vector<2x8x32xf32> to vector<2x8x8xf32>
    "tpu.trace_start"() <{level = 10 : i32, message = "bqd,bkd->bqk"}> : () -> ()
    %cst_44 = arith.constant dense<0.000000e+00> : vector<2x8x8xf32>
    %120 = tpu.matmul %117, %118, %cst_44 {dimension_numbers = #tpu.dot_dimension_numbers<[2], [2], [1], [1], [0, 0, 0, 1, 1, 1], [0], [0]>} : vector<2x8x8xf32>, vector<2x8x8xf32>, vector<2x8x8xf32> -> vector<2x8x8xf32>
    "tpu.trace_stop"() : () -> ()
    %cst_45 = arith.constant 0.353553385 : f32
    %121 = vector.broadcast %cst_45 : f32 to vector<2x8x8xf32>
    %122 = arith.mulf %120, %121 : vector<2x8x8xf32>
    %123 = vector.broadcast %28 : vector<2x1x8xf32> to vector<2x8x8xf32>
    %124 = arith.addf %122, %123 : vector<2x8x8xf32>
    %cst_46 = arith.constant dense<0xFF800000> : vector<2x8xf32>
    %125 = vector.multi_reduction <maximumf>, %124, %cst_46 [2] : vector<2x8x8xf32> to vector<2x8xf32>
    %126 = vector.shape_cast %125 : vector<2x8xf32> to vector<2x8x1xf32>
    %127 = vector.broadcast %126 : vector<2x8x1xf32> to vector<2x8x8xf32>
    %128 = arith.subf %124, %127 : vector<2x8x8xf32>
    %129 = math.exp %128 : vector<2x8x8xf32>
    %cst_47 = arith.constant dense<0.000000e+00> : vector<2x8xf32>
    %130 = vector.multi_reduction <add>, %129, %cst_47 [2] : vector<2x8x8xf32> to vector<2x8xf32>
    %131 = vector.shape_cast %130 : vector<2x8xf32> to vector<2x8x1xf32>
    %132 = tpu.reciprocal %131 {approx = true} : vector<2x8x1xf32> -> vector<2x8x1xf32>
    %133 = vector.broadcast %132 : vector<2x8x1xf32> to vector<2x8x8xf32>
    %134 = arith.mulf %129, %133 : vector<2x8x8xf32>
    "tpu.trace_start"() <{level = 10 : i32, message = "bqk,bkd->bqd"}> : () -> ()
    %cst_48 = arith.constant dense<0.000000e+00> : vector<2x8x8xf32>
    %135 = tpu.matmul %134, %119, %cst_48 {dimension_numbers = #tpu.dot_dimension_numbers<[2], [1], [1], [2], [0, 0, 0, 1, 1, 2], [0], [0]>} : vector<2x8x8xf32>, vector<2x8x8xf32>, vector<2x8x8xf32> -> vector<2x8x8xf32>
    "tpu.trace_stop"() : () -> ()
    %136 = vector.shape_cast %135 : vector<2x8x8xf32> to vector<16x8xf32>
    %137 = vector.extract_strided_slice %32 {offsets = [3, 0, 0], sizes = [1, 8, 32], strides = [1, 1, 1]} : vector<4x8x32xf32> to vector<1x8x32xf32>
    %138 = vector.shape_cast %137 : vector<1x8x32xf32> to vector<8x32xf32>
    %cst_49 = arith.constant dense<0.000000e+00> : vector<16x32xf32>
    %139 = tpu.matmul %136, %138, %cst_49 {dimension_numbers = #tpu.dot_dimension_numbers<[1], [0], [0], [1], [0, 0, 1, 1], [], []>} : vector<16x8xf32>, vector<8x32xf32>, vector<16x32xf32> -> vector<16x32xf32>
    %140 = arith.addf %116, %139 : vector<16x32xf32>
    %141 = vector.extract_strided_slice %30 {offsets = [0, 0], sizes = [1, 32], strides = [1, 1]} : vector<6x32xf32> to vector<1x32xf32>
    %142 = vector.broadcast %141 : vector<1x32xf32> to vector<16x32xf32>
    %143 = arith.addf %140, %142 : vector<16x32xf32>
    %144 = arith.addf %143, %23 : vector<16x32xf32>
    %145 = vector.extract_strided_slice %30 {offsets = [1, 0], sizes = [1, 32], strides = [1, 1]} : vector<6x32xf32> to vector<1x32xf32>
    %146 = vector.extract_strided_slice %30 {offsets = [2, 0], sizes = [1, 32], strides = [1, 1]} : vector<6x32xf32> to vector<1x32xf32>
    %cst_50 = arith.constant dense<0.000000e+00> : vector<16xf32>
    %147 = vector.multi_reduction <add>, %144, %cst_50 [1] : vector<16x32xf32> to vector<16xf32>
    %148 = vector.shape_cast %147 : vector<16xf32> to vector<16x1xf32>
    %cst_51 = arith.constant 3.200000e+01 : f32
    %149 = vector.broadcast %cst_51 : f32 to vector<16x1xf32>
    %150 = arith.divf %148, %149 : vector<16x1xf32>
    %151 = vector.broadcast %150 : vector<16x1xf32> to vector<16x32xf32>
    %152 = arith.subf %144, %151 : vector<16x32xf32>
    %153 = arith.mulf %152, %152 : vector<16x32xf32>
    %cst_52 = arith.constant dense<0.000000e+00> : vector<16xf32>
    %154 = vector.multi_reduction <add>, %153, %cst_52 [1] : vector<16x32xf32> to vector<16xf32>
    %155 = vector.shape_cast %154 : vector<16xf32> to vector<16x1xf32>
    %cst_53 = arith.constant 3.200000e+01 : f32
    %156 = vector.broadcast %cst_53 : f32 to vector<16x1xf32>
    %157 = arith.divf %155, %156 : vector<16x1xf32>
    %cst_54 = arith.constant 9.99999996E-13 : f32
    %158 = vector.broadcast %cst_54 : f32 to vector<16x1xf32>
    %159 = arith.addf %157, %158 : vector<16x1xf32>
    %160 = math.rsqrt %159 : vector<16x1xf32>
    %161 = vector.broadcast %160 : vector<16x1xf32> to vector<16x32xf32>
    %162 = arith.mulf %152, %161 : vector<16x32xf32>
    %163 = vector.broadcast %145 : vector<1x32xf32> to vector<16x32xf32>
    %164 = arith.mulf %162, %163 : vector<16x32xf32>
    %165 = vector.broadcast %146 : vector<1x32xf32> to vector<16x32xf32>
    %166 = arith.addf %164, %165 : vector<16x32xf32>
    %c0_55 = arith.constant 0 : index
    %c0_56 = arith.constant 0 : index
    %c0_57 = arith.constant 0 : index
    %167 = vector.load %arg7[%c0_55, %c0_56, %c0_57] : memref<2x32x64xf32, #tpu.memory_space<vmem>>, vector<1x32x64xf32>
    %168 = vector.shape_cast %167 : vector<1x32x64xf32> to vector<32x64xf32>
    %cst_58 = arith.constant dense<0.000000e+00> : vector<16x64xf32>
    %169 = tpu.matmul %166, %168, %cst_58 {dimension_numbers = #tpu.dot_dimension_numbers<[1], [0], [0], [1], [0, 0, 1, 1], [], []>} : vector<16x32xf32>, vector<32x64xf32>, vector<16x64xf32> -> vector<16x64xf32>
    %c0_59 = arith.constant 0 : index
    %c0_60 = arith.constant 0 : index
    %c0_61 = arith.constant 0 : index
    %170 = vector.load %arg8[%c0_59, %c0_60, %c0_61] : memref<2x1x64xf32, #tpu.memory_space<vmem>>, vector<1x1x64xf32>
    %171 = vector.shape_cast %170 : vector<1x1x64xf32> to vector<1x64xf32>
    %172 = vector.broadcast %171 : vector<1x64xf32> to vector<16x64xf32>
    %173 = arith.addf %169, %172 : vector<16x64xf32>
    %cst_62 = arith.constant 5.000000e-01 : f32
    %174 = vector.broadcast %cst_62 : f32 to vector<16x64xf32>
    %175 = arith.mulf %174, %173 : vector<16x64xf32>
    %cst_63 = arith.constant 4.471500e-02 : f32
    %176 = vector.broadcast %cst_63 : f32 to vector<16x64xf32>
    %177 = arith.mulf %176, %173 : vector<16x64xf32>
    %178 = arith.mulf %177, %173 : vector<16x64xf32>
    %179 = arith.mulf %178, %173 : vector<16x64xf32>
    %180 = arith.addf %173, %179 : vector<16x64xf32>
    %cst_64 = arith.constant 0.797884583 : f32
    %181 = vector.broadcast %cst_64 : f32 to vector<16x64xf32>
    %182 = arith.mulf %181, %180 : vector<16x64xf32>
    %183 = math.tanh %182 : vector<16x64xf32>
    %cst_65 = arith.constant 1.000000e+00 : f32
    %184 = vector.broadcast %cst_65 : f32 to vector<16x64xf32>
    %185 = arith.addf %184, %183 : vector<16x64xf32>
    %186 = arith.mulf %175, %185 : vector<16x64xf32>
    %c0_66 = arith.constant 0 : index
    %c0_67 = arith.constant 0 : index
    %c0_68 = arith.constant 0 : index
    %187 = vector.load %arg9[%c0_66, %c0_67, %c0_68] : memref<2x64x32xf32, #tpu.memory_space<vmem>>, vector<1x64x32xf32>
    %188 = vector.shape_cast %187 : vector<1x64x32xf32> to vector<64x32xf32>
    %cst_69 = arith.constant dense<0.000000e+00> : vector<16x32xf32>
    %189 = tpu.matmul %186, %188, %cst_69 {dimension_numbers = #tpu.dot_dimension_numbers<[1], [0], [0], [1], [0, 0, 1, 1], [], []>} : vector<16x64xf32>, vector<64x32xf32>, vector<16x32xf32> -> vector<16x32xf32>
    %190 = vector.extract_strided_slice %30 {offsets = [3, 0], sizes = [1, 32], strides = [1, 1]} : vector<6x32xf32> to vector<1x32xf32>
    %191 = vector.broadcast %190 : vector<1x32xf32> to vector<16x32xf32>
    %192 = arith.addf %189, %191 : vector<16x32xf32>
    %193 = arith.addf %192, %166 : vector<16x32xf32>
    %194 = vector.extract_strided_slice %30 {offsets = [4, 0], sizes = [1, 32], strides = [1, 1]} : vector<6x32xf32> to vector<1x32xf32>
    %195 = vector.extract_strided_slice %30 {offsets = [5, 0], sizes = [1, 32], strides = [1, 1]} : vector<6x32xf32> to vector<1x32xf32>
    %cst_70 = arith.constant dense<0.000000e+00> : vector<16xf32>
    %196 = vector.multi_reduction <add>, %193, %cst_70 [1] : vector<16x32xf32> to vector<16xf32>
    %197 = vector.shape_cast %196 : vector<16xf32> to vector<16x1xf32>
    %cst_71 = arith.constant 3.200000e+01 : f32
    %198 = vector.broadcast %cst_71 : f32 to vector<16x1xf32>
    %199 = arith.divf %197, %198 : vector<16x1xf32>
    %200 = vector.broadcast %199 : vector<16x1xf32> to vector<16x32xf32>
    %201 = arith.subf %193, %200 : vector<16x32xf32>
    %202 = arith.mulf %201, %201 : vector<16x32xf32>
    %cst_72 = arith.constant dense<0.000000e+00> : vector<16xf32>
    %203 = vector.multi_reduction <add>, %202, %cst_72 [1] : vector<16x32xf32> to vector<16xf32>
    %204 = vector.shape_cast %203 : vector<16xf32> to vector<16x1xf32>
    %cst_73 = arith.constant 3.200000e+01 : f32
    %205 = vector.broadcast %cst_73 : f32 to vector<16x1xf32>
    %206 = arith.divf %204, %205 : vector<16x1xf32>
    %cst_74 = arith.constant 9.99999996E-13 : f32
    %207 = vector.broadcast %cst_74 : f32 to vector<16x1xf32>
    %208 = arith.addf %206, %207 : vector<16x1xf32>
    %209 = math.rsqrt %208 : vector<16x1xf32>
    %210 = vector.broadcast %209 : vector<16x1xf32> to vector<16x32xf32>
    %211 = arith.mulf %201, %210 : vector<16x32xf32>
    %212 = vector.broadcast %194 : vector<1x32xf32> to vector<16x32xf32>
    %213 = arith.mulf %211, %212 : vector<16x32xf32>
    %214 = vector.broadcast %195 : vector<1x32xf32> to vector<16x32xf32>
    %215 = arith.addf %213, %214 : vector<16x32xf32>
    %c1 = arith.constant 1 : index
    %c0_75 = arith.constant 0 : index
    %c0_76 = arith.constant 0 : index
    %216 = vector.load %arg6[%c1, %c0_75, %c0_76] : memref<2x6x32xf32, #tpu.memory_space<vmem>>, vector<1x6x32xf32>
    %217 = vector.shape_cast %216 : vector<1x6x32xf32> to vector<6x32xf32>
    %c1_77 = arith.constant 1 : index
    %c0_78 = arith.constant 0 : index
    %c0_79 = arith.constant 0 : index
    %c0_80 = arith.constant 0 : index
    %218 = vector.load %arg5[%c1_77, %c0_78, %c0_79, %c0_80] : memref<2x4x8x32xf32, #tpu.memory_space<vmem>>, vector<1x4x8x32xf32>
    %219 = vector.shape_cast %218 : vector<1x4x8x32xf32> to vector<4x8x32xf32>
    %c1_81 = arith.constant 1 : index
    %c0_82 = arith.constant 0 : index
    %c0_83 = arith.constant 0 : index
    %220 = vector.load %arg3[%c1_81, %c0_82, %c0_83] : memref<2x32x96xf32, #tpu.memory_space<vmem>>, vector<1x32x96xf32>
    %221 = vector.shape_cast %220 : vector<1x32x96xf32> to vector<32x96xf32>
    %cst_84 = arith.constant dense<0.000000e+00> : vector<16x96xf32>
    %222 = tpu.matmul %215, %221, %cst_84 {dimension_numbers = #tpu.dot_dimension_numbers<[1], [0], [0], [1], [0, 0, 1, 1], [], []>} : vector<16x32xf32>, vector<32x96xf32>, vector<16x96xf32> -> vector<16x96xf32>
    %c1_85 = arith.constant 1 : index
    %c0_86 = arith.constant 0 : index
    %c0_87 = arith.constant 0 : index
    %223 = vector.load %arg4[%c1_85, %c0_86, %c0_87] : memref<2x1x96xf32, #tpu.memory_space<vmem>>, vector<1x1x96xf32>
    %224 = vector.shape_cast %223 : vector<1x1x96xf32> to vector<1x96xf32>
    %225 = vector.broadcast %224 : vector<1x96xf32> to vector<16x96xf32>
    %226 = arith.addf %222, %225 : vector<16x96xf32>
    %227 = vector.extract_strided_slice %226 {offsets = [0, 0], sizes = [16, 32], strides = [1, 1]} : vector<16x96xf32> to vector<16x32xf32>
    %228 = vector.shape_cast %227 : vector<16x32xf32> to vector<2x8x32xf32>
    %229 = vector.extract_strided_slice %226 {offsets = [0, 32], sizes = [16, 32], strides = [1, 1]} : vector<16x96xf32> to vector<16x32xf32>
    %230 = vector.shape_cast %229 : vector<16x32xf32> to vector<2x8x32xf32>
    %231 = vector.extract_strided_slice %226 {offsets = [0, 64], sizes = [16, 32], strides = [1, 1]} : vector<16x96xf32> to vector<16x32xf32>
    %232 = vector.shape_cast %231 : vector<16x32xf32> to vector<2x8x32xf32>
    %233 = vector.extract_strided_slice %228 {offsets = [0, 0, 0], sizes = [2, 8, 8], strides = [1, 1, 1]} : vector<2x8x32xf32> to vector<2x8x8xf32>
    %234 = vector.extract_strided_slice %230 {offsets = [0, 0, 0], sizes = [2, 8, 8], strides = [1, 1, 1]} : vector<2x8x32xf32> to vector<2x8x8xf32>
    %235 = vector.extract_strided_slice %232 {offsets = [0, 0, 0], sizes = [2, 8, 8], strides = [1, 1, 1]} : vector<2x8x32xf32> to vector<2x8x8xf32>
    "tpu.trace_start"() <{level = 10 : i32, message = "bqd,bkd->bqk"}> : () -> ()
    %cst_88 = arith.constant dense<0.000000e+00> : vector<2x8x8xf32>
    %236 = tpu.matmul %233, %234, %cst_88 {dimension_numbers = #tpu.dot_dimension_numbers<[2], [2], [1], [1], [0, 0, 0, 1, 1, 1], [0], [0]>} : vector<2x8x8xf32>, vector<2x8x8xf32>, vector<2x8x8xf32> -> vector<2x8x8xf32>
    "tpu.trace_stop"() : () -> ()
    %cst_89 = arith.constant 0.353553385 : f32
    %237 = vector.broadcast %cst_89 : f32 to vector<2x8x8xf32>
    %238 = arith.mulf %236, %237 : vector<2x8x8xf32>
    %239 = vector.broadcast %28 : vector<2x1x8xf32> to vector<2x8x8xf32>
    %240 = arith.addf %238, %239 : vector<2x8x8xf32>
    %cst_90 = arith.constant dense<0xFF800000> : vector<2x8xf32>
    %241 = vector.multi_reduction <maximumf>, %240, %cst_90 [2] : vector<2x8x8xf32> to vector<2x8xf32>
    %242 = vector.shape_cast %241 : vector<2x8xf32> to vector<2x8x1xf32>
    %243 = vector.broadcast %242 : vector<2x8x1xf32> to vector<2x8x8xf32>
    %244 = arith.subf %240, %243 : vector<2x8x8xf32>
    %245 = math.exp %244 : vector<2x8x8xf32>
    %cst_91 = arith.constant dense<0.000000e+00> : vector<2x8xf32>
    %246 = vector.multi_reduction <add>, %245, %cst_91 [2] : vector<2x8x8xf32> to vector<2x8xf32>
    %247 = vector.shape_cast %246 : vector<2x8xf32> to vector<2x8x1xf32>
    %248 = tpu.reciprocal %247 {approx = true} : vector<2x8x1xf32> -> vector<2x8x1xf32>
    %249 = vector.broadcast %248 : vector<2x8x1xf32> to vector<2x8x8xf32>
    %250 = arith.mulf %245, %249 : vector<2x8x8xf32>
    "tpu.trace_start"() <{level = 10 : i32, message = "bqk,bkd->bqd"}> : () -> ()
    %cst_92 = arith.constant dense<0.000000e+00> : vector<2x8x8xf32>
    %251 = tpu.matmul %250, %235, %cst_92 {dimension_numbers = #tpu.dot_dimension_numbers<[2], [1], [1], [2], [0, 0, 0, 1, 1, 2], [0], [0]>} : vector<2x8x8xf32>, vector<2x8x8xf32>, vector<2x8x8xf32> -> vector<2x8x8xf32>
    "tpu.trace_stop"() : () -> ()
    %252 = vector.shape_cast %251 : vector<2x8x8xf32> to vector<16x8xf32>
    %253 = vector.extract_strided_slice %219 {offsets = [0, 0, 0], sizes = [1, 8, 32], strides = [1, 1, 1]} : vector<4x8x32xf32> to vector<1x8x32xf32>
    %254 = vector.shape_cast %253 : vector<1x8x32xf32> to vector<8x32xf32>
    %cst_93 = arith.constant dense<0.000000e+00> : vector<16x32xf32>
    %255 = tpu.matmul %252, %254, %cst_93 {dimension_numbers = #tpu.dot_dimension_numbers<[1], [0], [0], [1], [0, 0, 1, 1], [], []>} : vector<16x8xf32>, vector<8x32xf32>, vector<16x32xf32> -> vector<16x32xf32>
    %256 = vector.extract_strided_slice %228 {offsets = [0, 0, 8], sizes = [2, 8, 8], strides = [1, 1, 1]} : vector<2x8x32xf32> to vector<2x8x8xf32>
    %257 = vector.extract_strided_slice %230 {offsets = [0, 0, 8], sizes = [2, 8, 8], strides = [1, 1, 1]} : vector<2x8x32xf32> to vector<2x8x8xf32>
    %258 = vector.extract_strided_slice %232 {offsets = [0, 0, 8], sizes = [2, 8, 8], strides = [1, 1, 1]} : vector<2x8x32xf32> to vector<2x8x8xf32>
    "tpu.trace_start"() <{level = 10 : i32, message = "bqd,bkd->bqk"}> : () -> ()
    %cst_94 = arith.constant dense<0.000000e+00> : vector<2x8x8xf32>
    %259 = tpu.matmul %256, %257, %cst_94 {dimension_numbers = #tpu.dot_dimension_numbers<[2], [2], [1], [1], [0, 0, 0, 1, 1, 1], [0], [0]>} : vector<2x8x8xf32>, vector<2x8x8xf32>, vector<2x8x8xf32> -> vector<2x8x8xf32>
    "tpu.trace_stop"() : () -> ()
    %cst_95 = arith.constant 0.353553385 : f32
    %260 = vector.broadcast %cst_95 : f32 to vector<2x8x8xf32>
    %261 = arith.mulf %259, %260 : vector<2x8x8xf32>
    %262 = vector.broadcast %28 : vector<2x1x8xf32> to vector<2x8x8xf32>
    %263 = arith.addf %261, %262 : vector<2x8x8xf32>
    %cst_96 = arith.constant dense<0xFF800000> : vector<2x8xf32>
    %264 = vector.multi_reduction <maximumf>, %263, %cst_96 [2] : vector<2x8x8xf32> to vector<2x8xf32>
    %265 = vector.shape_cast %264 : vector<2x8xf32> to vector<2x8x1xf32>
    %266 = vector.broadcast %265 : vector<2x8x1xf32> to vector<2x8x8xf32>
    %267 = arith.subf %263, %266 : vector<2x8x8xf32>
    %268 = math.exp %267 : vector<2x8x8xf32>
    %cst_97 = arith.constant dense<0.000000e+00> : vector<2x8xf32>
    %269 = vector.multi_reduction <add>, %268, %cst_97 [2] : vector<2x8x8xf32> to vector<2x8xf32>
    %270 = vector.shape_cast %269 : vector<2x8xf32> to vector<2x8x1xf32>
    %271 = tpu.reciprocal %270 {approx = true} : vector<2x8x1xf32> -> vector<2x8x1xf32>
    %272 = vector.broadcast %271 : vector<2x8x1xf32> to vector<2x8x8xf32>
    %273 = arith.mulf %268, %272 : vector<2x8x8xf32>
    "tpu.trace_start"() <{level = 10 : i32, message = "bqk,bkd->bqd"}> : () -> ()
    %cst_98 = arith.constant dense<0.000000e+00> : vector<2x8x8xf32>
    %274 = tpu.matmul %273, %258, %cst_98 {dimension_numbers = #tpu.dot_dimension_numbers<[2], [1], [1], [2], [0, 0, 0, 1, 1, 2], [0], [0]>} : vector<2x8x8xf32>, vector<2x8x8xf32>, vector<2x8x8xf32> -> vector<2x8x8xf32>
    "tpu.trace_stop"() : () -> ()
    %275 = vector.shape_cast %274 : vector<2x8x8xf32> to vector<16x8xf32>
    %276 = vector.extract_strided_slice %219 {offsets = [1, 0, 0], sizes = [1, 8, 32], strides = [1, 1, 1]} : vector<4x8x32xf32> to vector<1x8x32xf32>
    %277 = vector.shape_cast %276 : vector<1x8x32xf32> to vector<8x32xf32>
    %cst_99 = arith.constant dense<0.000000e+00> : vector<16x32xf32>
    %278 = tpu.matmul %275, %277, %cst_99 {dimension_numbers = #tpu.dot_dimension_numbers<[1], [0], [0], [1], [0, 0, 1, 1], [], []>} : vector<16x8xf32>, vector<8x32xf32>, vector<16x32xf32> -> vector<16x32xf32>
    %279 = arith.addf %255, %278 : vector<16x32xf32>
    %280 = vector.extract_strided_slice %228 {offsets = [0, 0, 16], sizes = [2, 8, 8], strides = [1, 1, 1]} : vector<2x8x32xf32> to vector<2x8x8xf32>
    %281 = vector.extract_strided_slice %230 {offsets = [0, 0, 16], sizes = [2, 8, 8], strides = [1, 1, 1]} : vector<2x8x32xf32> to vector<2x8x8xf32>
    %282 = vector.extract_strided_slice %232 {offsets = [0, 0, 16], sizes = [2, 8, 8], strides = [1, 1, 1]} : vector<2x8x32xf32> to vector<2x8x8xf32>
    "tpu.trace_start"() <{level = 10 : i32, message = "bqd,bkd->bqk"}> : () -> ()
    %cst_100 = arith.constant dense<0.000000e+00> : vector<2x8x8xf32>
    %283 = tpu.matmul %280, %281, %cst_100 {dimension_numbers = #tpu.dot_dimension_numbers<[2], [2], [1], [1], [0, 0, 0, 1, 1, 1], [0], [0]>} : vector<2x8x8xf32>, vector<2x8x8xf32>, vector<2x8x8xf32> -> vector<2x8x8xf32>
    "tpu.trace_stop"() : () -> ()
    %cst_101 = arith.constant 0.353553385 : f32
    %284 = vector.broadcast %cst_101 : f32 to vector<2x8x8xf32>
    %285 = arith.mulf %283, %284 : vector<2x8x8xf32>
    %286 = vector.broadcast %28 : vector<2x1x8xf32> to vector<2x8x8xf32>
    %287 = arith.addf %285, %286 : vector<2x8x8xf32>
    %cst_102 = arith.constant dense<0xFF800000> : vector<2x8xf32>
    %288 = vector.multi_reduction <maximumf>, %287, %cst_102 [2] : vector<2x8x8xf32> to vector<2x8xf32>
    %289 = vector.shape_cast %288 : vector<2x8xf32> to vector<2x8x1xf32>
    %290 = vector.broadcast %289 : vector<2x8x1xf32> to vector<2x8x8xf32>
    %291 = arith.subf %287, %290 : vector<2x8x8xf32>
    %292 = math.exp %291 : vector<2x8x8xf32>
    %cst_103 = arith.constant dense<0.000000e+00> : vector<2x8xf32>
    %293 = vector.multi_reduction <add>, %292, %cst_103 [2] : vector<2x8x8xf32> to vector<2x8xf32>
    %294 = vector.shape_cast %293 : vector<2x8xf32> to vector<2x8x1xf32>
    %295 = tpu.reciprocal %294 {approx = true} : vector<2x8x1xf32> -> vector<2x8x1xf32>
    %296 = vector.broadcast %295 : vector<2x8x1xf32> to vector<2x8x8xf32>
    %297 = arith.mulf %292, %296 : vector<2x8x8xf32>
    "tpu.trace_start"() <{level = 10 : i32, message = "bqk,bkd->bqd"}> : () -> ()
    %cst_104 = arith.constant dense<0.000000e+00> : vector<2x8x8xf32>
    %298 = tpu.matmul %297, %282, %cst_104 {dimension_numbers = #tpu.dot_dimension_numbers<[2], [1], [1], [2], [0, 0, 0, 1, 1, 2], [0], [0]>} : vector<2x8x8xf32>, vector<2x8x8xf32>, vector<2x8x8xf32> -> vector<2x8x8xf32>
    "tpu.trace_stop"() : () -> ()
    %299 = vector.shape_cast %298 : vector<2x8x8xf32> to vector<16x8xf32>
    %300 = vector.extract_strided_slice %219 {offsets = [2, 0, 0], sizes = [1, 8, 32], strides = [1, 1, 1]} : vector<4x8x32xf32> to vector<1x8x32xf32>
    %301 = vector.shape_cast %300 : vector<1x8x32xf32> to vector<8x32xf32>
    %cst_105 = arith.constant dense<0.000000e+00> : vector<16x32xf32>
    %302 = tpu.matmul %299, %301, %cst_105 {dimension_numbers = #tpu.dot_dimension_numbers<[1], [0], [0], [1], [0, 0, 1, 1], [], []>} : vector<16x8xf32>, vector<8x32xf32>, vector<16x32xf32> -> vector<16x32xf32>
    %303 = arith.addf %279, %302 : vector<16x32xf32>
    %304 = vector.extract_strided_slice %228 {offsets = [0, 0, 24], sizes = [2, 8, 8], strides = [1, 1, 1]} : vector<2x8x32xf32> to vector<2x8x8xf32>
    %305 = vector.extract_strided_slice %230 {offsets = [0, 0, 24], sizes = [2, 8, 8], strides = [1, 1, 1]} : vector<2x8x32xf32> to vector<2x8x8xf32>
    %306 = vector.extract_strided_slice %232 {offsets = [0, 0, 24], sizes = [2, 8, 8], strides = [1, 1, 1]} : vector<2x8x32xf32> to vector<2x8x8xf32>
    "tpu.trace_start"() <{level = 10 : i32, message = "bqd,bkd->bqk"}> : () -> ()
    %cst_106 = arith.constant dense<0.000000e+00> : vector<2x8x8xf32>
    %307 = tpu.matmul %304, %305, %cst_106 {dimension_numbers = #tpu.dot_dimension_numbers<[2], [2], [1], [1], [0, 0, 0, 1, 1, 1], [0], [0]>} : vector<2x8x8xf32>, vector<2x8x8xf32>, vector<2x8x8xf32> -> vector<2x8x8xf32>
    "tpu.trace_stop"() : () -> ()
    %cst_107 = arith.constant 0.353553385 : f32
    %308 = vector.broadcast %cst_107 : f32 to vector<2x8x8xf32>
    %309 = arith.mulf %307, %308 : vector<2x8x8xf32>
    %310 = vector.broadcast %28 : vector<2x1x8xf32> to vector<2x8x8xf32>
    %311 = arith.addf %309, %310 : vector<2x8x8xf32>
    %cst_108 = arith.constant dense<0xFF800000> : vector<2x8xf32>
    %312 = vector.multi_reduction <maximumf>, %311, %cst_108 [2] : vector<2x8x8xf32> to vector<2x8xf32>
    %313 = vector.shape_cast %312 : vector<2x8xf32> to vector<2x8x1xf32>
    %314 = vector.broadcast %313 : vector<2x8x1xf32> to vector<2x8x8xf32>
    %315 = arith.subf %311, %314 : vector<2x8x8xf32>
    %316 = math.exp %315 : vector<2x8x8xf32>
    %cst_109 = arith.constant dense<0.000000e+00> : vector<2x8xf32>
    %317 = vector.multi_reduction <add>, %316, %cst_109 [2] : vector<2x8x8xf32> to vector<2x8xf32>
    %318 = vector.shape_cast %317 : vector<2x8xf32> to vector<2x8x1xf32>
    %319 = tpu.reciprocal %318 {approx = true} : vector<2x8x1xf32> -> vector<2x8x1xf32>
    %320 = vector.broadcast %319 : vector<2x8x1xf32> to vector<2x8x8xf32>
    %321 = arith.mulf %316, %320 : vector<2x8x8xf32>
    "tpu.trace_start"() <{level = 10 : i32, message = "bqk,bkd->bqd"}> : () -> ()
    %cst_110 = arith.constant dense<0.000000e+00> : vector<2x8x8xf32>
    %322 = tpu.matmul %321, %306, %cst_110 {dimension_numbers = #tpu.dot_dimension_numbers<[2], [1], [1], [2], [0, 0, 0, 1, 1, 2], [0], [0]>} : vector<2x8x8xf32>, vector<2x8x8xf32>, vector<2x8x8xf32> -> vector<2x8x8xf32>
    "tpu.trace_stop"() : () -> ()
    %323 = vector.shape_cast %322 : vector<2x8x8xf32> to vector<16x8xf32>
    %324 = vector.extract_strided_slice %219 {offsets = [3, 0, 0], sizes = [1, 8, 32], strides = [1, 1, 1]} : vector<4x8x32xf32> to vector<1x8x32xf32>
    %325 = vector.shape_cast %324 : vector<1x8x32xf32> to vector<8x32xf32>
    %cst_111 = arith.constant dense<0.000000e+00> : vector<16x32xf32>
    %326 = tpu.matmul %323, %325, %cst_111 {dimension_numbers = #tpu.dot_dimension_numbers<[1], [0], [0], [1], [0, 0, 1, 1], [], []>} : vector<16x8xf32>, vector<8x32xf32>, vector<16x32xf32> -> vector<16x32xf32>
    %327 = arith.addf %303, %326 : vector<16x32xf32>
    %328 = vector.extract_strided_slice %217 {offsets = [0, 0], sizes = [1, 32], strides = [1, 1]} : vector<6x32xf32> to vector<1x32xf32>
    %329 = vector.broadcast %328 : vector<1x32xf32> to vector<16x32xf32>
    %330 = arith.addf %327, %329 : vector<16x32xf32>
    %331 = arith.addf %330, %215 : vector<16x32xf32>
    %332 = vector.extract_strided_slice %217 {offsets = [1, 0], sizes = [1, 32], strides = [1, 1]} : vector<6x32xf32> to vector<1x32xf32>
    %333 = vector.extract_strided_slice %217 {offsets = [2, 0], sizes = [1, 32], strides = [1, 1]} : vector<6x32xf32> to vector<1x32xf32>
    %cst_112 = arith.constant dense<0.000000e+00> : vector<16xf32>
    %334 = vector.multi_reduction <add>, %331, %cst_112 [1] : vector<16x32xf32> to vector<16xf32>
    %335 = vector.shape_cast %334 : vector<16xf32> to vector<16x1xf32>
    %cst_113 = arith.constant 3.200000e+01 : f32
    %336 = vector.broadcast %cst_113 : f32 to vector<16x1xf32>
    %337 = arith.divf %335, %336 : vector<16x1xf32>
    %338 = vector.broadcast %337 : vector<16x1xf32> to vector<16x32xf32>
    %339 = arith.subf %331, %338 : vector<16x32xf32>
    %340 = arith.mulf %339, %339 : vector<16x32xf32>
    %cst_114 = arith.constant dense<0.000000e+00> : vector<16xf32>
    %341 = vector.multi_reduction <add>, %340, %cst_114 [1] : vector<16x32xf32> to vector<16xf32>
    %342 = vector.shape_cast %341 : vector<16xf32> to vector<16x1xf32>
    %cst_115 = arith.constant 3.200000e+01 : f32
    %343 = vector.broadcast %cst_115 : f32 to vector<16x1xf32>
    %344 = arith.divf %342, %343 : vector<16x1xf32>
    %cst_116 = arith.constant 9.99999996E-13 : f32
    %345 = vector.broadcast %cst_116 : f32 to vector<16x1xf32>
    %346 = arith.addf %344, %345 : vector<16x1xf32>
    %347 = math.rsqrt %346 : vector<16x1xf32>
    %348 = vector.broadcast %347 : vector<16x1xf32> to vector<16x32xf32>
    %349 = arith.mulf %339, %348 : vector<16x32xf32>
    %350 = vector.broadcast %332 : vector<1x32xf32> to vector<16x32xf32>
    %351 = arith.mulf %349, %350 : vector<16x32xf32>
    %352 = vector.broadcast %333 : vector<1x32xf32> to vector<16x32xf32>
    %353 = arith.addf %351, %352 : vector<16x32xf32>
    %c1_117 = arith.constant 1 : index
    %c0_118 = arith.constant 0 : index
    %c0_119 = arith.constant 0 : index
    %354 = vector.load %arg7[%c1_117, %c0_118, %c0_119] : memref<2x32x64xf32, #tpu.memory_space<vmem>>, vector<1x32x64xf32>
    %355 = vector.shape_cast %354 : vector<1x32x64xf32> to vector<32x64xf32>
    %cst_120 = arith.constant dense<0.000000e+00> : vector<16x64xf32>
    %356 = tpu.matmul %353, %355, %cst_120 {dimension_numbers = #tpu.dot_dimension_numbers<[1], [0], [0], [1], [0, 0, 1, 1], [], []>} : vector<16x32xf32>, vector<32x64xf32>, vector<16x64xf32> -> vector<16x64xf32>
    %c1_121 = arith.constant 1 : index
    %c0_122 = arith.constant 0 : index
    %c0_123 = arith.constant 0 : index
    %357 = vector.load %arg8[%c1_121, %c0_122, %c0_123] : memref<2x1x64xf32, #tpu.memory_space<vmem>>, vector<1x1x64xf32>
    %358 = vector.shape_cast %357 : vector<1x1x64xf32> to vector<1x64xf32>
    %359 = vector.broadcast %358 : vector<1x64xf32> to vector<16x64xf32>
    %360 = arith.addf %356, %359 : vector<16x64xf32>
    %cst_124 = arith.constant 5.000000e-01 : f32
    %361 = vector.broadcast %cst_124 : f32 to vector<16x64xf32>
    %362 = arith.mulf %361, %360 : vector<16x64xf32>
    %cst_125 = arith.constant 4.471500e-02 : f32
    %363 = vector.broadcast %cst_125 : f32 to vector<16x64xf32>
    %364 = arith.mulf %363, %360 : vector<16x64xf32>
    %365 = arith.mulf %364, %360 : vector<16x64xf32>
    %366 = arith.mulf %365, %360 : vector<16x64xf32>
    %367 = arith.addf %360, %366 : vector<16x64xf32>
    %cst_126 = arith.constant 0.797884583 : f32
    %368 = vector.broadcast %cst_126 : f32 to vector<16x64xf32>
    %369 = arith.mulf %368, %367 : vector<16x64xf32>
    %370 = math.tanh %369 : vector<16x64xf32>
    %cst_127 = arith.constant 1.000000e+00 : f32
    %371 = vector.broadcast %cst_127 : f32 to vector<16x64xf32>
    %372 = arith.addf %371, %370 : vector<16x64xf32>
    %373 = arith.mulf %362, %372 : vector<16x64xf32>
    %c1_128 = arith.constant 1 : index
    %c0_129 = arith.constant 0 : index
    %c0_130 = arith.constant 0 : index
    %374 = vector.load %arg9[%c1_128, %c0_129, %c0_130] : memref<2x64x32xf32, #tpu.memory_space<vmem>>, vector<1x64x32xf32>
    %375 = vector.shape_cast %374 : vector<1x64x32xf32> to vector<64x32xf32>
    %cst_131 = arith.constant dense<0.000000e+00> : vector<16x32xf32>
    %376 = tpu.matmul %373, %375, %cst_131 {dimension_numbers = #tpu.dot_dimension_numbers<[1], [0], [0], [1], [0, 0, 1, 1], [], []>} : vector<16x64xf32>, vector<64x32xf32>, vector<16x32xf32> -> vector<16x32xf32>
    %377 = vector.extract_strided_slice %217 {offsets = [3, 0], sizes = [1, 32], strides = [1, 1]} : vector<6x32xf32> to vector<1x32xf32>
    %378 = vector.broadcast %377 : vector<1x32xf32> to vector<16x32xf32>
    %379 = arith.addf %376, %378 : vector<16x32xf32>
    %380 = arith.addf %379, %353 : vector<16x32xf32>
    %381 = vector.extract_strided_slice %217 {offsets = [4, 0], sizes = [1, 32], strides = [1, 1]} : vector<6x32xf32> to vector<1x32xf32>
    %382 = vector.extract_strided_slice %217 {offsets = [5, 0], sizes = [1, 32], strides = [1, 1]} : vector<6x32xf32> to vector<1x32xf32>
    %cst_132 = arith.constant dense<0.000000e+00> : vector<16xf32>
    %383 = vector.multi_reduction <add>, %380, %cst_132 [1] : vector<16x32xf32> to vector<16xf32>
    %384 = vector.shape_cast %383 : vector<16xf32> to vector<16x1xf32>
    %cst_133 = arith.constant 3.200000e+01 : f32
    %385 = vector.broadcast %cst_133 : f32 to vector<16x1xf32>
    %386 = arith.divf %384, %385 : vector<16x1xf32>
    %387 = vector.broadcast %386 : vector<16x1xf32> to vector<16x32xf32>
    %388 = arith.subf %380, %387 : vector<16x32xf32>
    %389 = arith.mulf %388, %388 : vector<16x32xf32>
    %cst_134 = arith.constant dense<0.000000e+00> : vector<16xf32>
    %390 = vector.multi_reduction <add>, %389, %cst_134 [1] : vector<16x32xf32> to vector<16xf32>
    %391 = vector.shape_cast %390 : vector<16xf32> to vector<16x1xf32>
    %cst_135 = arith.constant 3.200000e+01 : f32
    %392 = vector.broadcast %cst_135 : f32 to vector<16x1xf32>
    %393 = arith.divf %391, %392 : vector<16x1xf32>
    %cst_136 = arith.constant 9.99999996E-13 : f32
    %394 = vector.broadcast %cst_136 : f32 to vector<16x1xf32>
    %395 = arith.addf %393, %394 : vector<16x1xf32>
    %396 = math.rsqrt %395 : vector<16x1xf32>
    %397 = vector.broadcast %396 : vector<16x1xf32> to vector<16x32xf32>
    %398 = arith.mulf %388, %397 : vector<16x32xf32>
    %399 = vector.broadcast %381 : vector<1x32xf32> to vector<16x32xf32>
    %400 = arith.mulf %398, %399 : vector<16x32xf32>
    %401 = vector.broadcast %382 : vector<1x32xf32> to vector<16x32xf32>
    %402 = arith.addf %400, %401 : vector<16x32xf32>
    %c0_137 = arith.constant 0 : index
    %c0_138 = arith.constant 0 : index
    %403 = vector.load %arg11[%c0_137, %c0_138] : memref<16x32xf32, #tpu.memory_space<vmem>>, vector<16x32xf32>
    tpu.vector_store %arg11[%c0_137, %c0_138], %402 {strides = array<i32>} : memref<16x32xf32, #tpu.memory_space<vmem>>, vector<16x32xf32>,
    %404 = vector.shape_cast %402 : vector<16x32xf32> to vector<2x8x32xf32>
    %405 = vector.extract_strided_slice %404 {offsets = [0, 0, 0], sizes = [2, 1, 32], strides = [1, 1, 1]} : vector<2x8x32xf32> to vector<2x1x32xf32>
    %406 = vector.shape_cast %405 : vector<2x1x32xf32> to vector<2x32xf32>
    %c0_139 = arith.constant 0 : index
    %c0_140 = arith.constant 0 : index
    %407 = vector.load %arg10[%c0_139, %c0_140] : memref<32x32xf32, #tpu.memory_space<vmem>>, vector<32x32xf32>
    %cst_141 = arith.constant dense<0.000000e+00> : vector<2x32xf32>
    %408 = tpu.matmul %406, %407, %cst_141 {dimension_numbers = #tpu.dot_dimension_numbers<[1], [0], [0], [1], [0, 0, 1, 1], [], []>} : vector<2x32xf32>, vector<32x32xf32>, vector<2x32xf32> -> vector<2x32xf32>
    %409 = vector.extract_strided_slice %0 {offsets = [2, 0], sizes = [1, 32], strides = [1, 1]} : vector<5x32xf32> to vector<1x32xf32>
    %410 = vector.broadcast %409 : vector<1x32xf32> to vector<2x32xf32>
    %411 = arith.addf %408, %410 : vector<2x32xf32>
    %412 = math.tanh %411 : vector<2x32xf32>
    %413 = vector.extract_strided_slice %0 {offsets = [3, 0], sizes = [1, 32], strides = [1, 1]} : vector<5x32xf32> to vector<1x32xf32>
    %414 = vector.broadcast %413 : vector<1x32xf32> to vector<2x32xf32>
    %415 = arith.mulf %412, %414 : vector<2x32xf32>
    %cst_142 = arith.constant dense<0.000000e+00> : vector<2xf32>
    %416 = vector.multi_reduction <add>, %415, %cst_142 [1] : vector<2x32xf32> to vector<2xf32>
    %417 = vector.shape_cast %416 : vector<2xf32> to vector<2x1xf32>
    %418 = vector.extract_strided_slice %0 {offsets = [4, 0], sizes = [1, 1], strides = [1, 1]} : vector<5x32xf32> to vector<1x1xf32>
    %419 = vector.broadcast %418 : vector<1x1xf32> to vector<2x1xf32>
    %420 = arith.addf %417, %419 : vector<2x1xf32>
    %c0_143 = arith.constant 0 : index
    %c0_144 = arith.constant 0 : index
    %421 = vector.load %arg12[%c0_143, %c0_144] : memref<2x1xf32, #tpu.memory_space<vmem>>, vector<2x1xf32>
    tpu.vector_store %arg12[%c0_143, %c0_144], %420 {strides = array<i32>} : memref<2x1xf32, #tpu.memory_space<vmem>>, vector<2x1xf32>,
    return
  }
}

</mosaic_0001>

<llo_original>
// kernel: tpu_custom_call.1
$region0: #{tpu_custom_call.1}
  #allocation0 [shape = 'u32[]', space=smem, size = 0x4, offset = 0x4, fixed_abs, tag = 'smem constant byte address 0x4 - core index']
  #allocation1 [shape = 'u32[72,128]{1,0:T(1,128)}', space=vmem, size = 0x9000, scoped, tag = 'internal scratch']
  %s0 = inlined_call_operand.hbm [shape: f32[16,32], index: 0, kind: input, shape index: {}]
  %s1 = inlined_call_operand.hbm [shape: f32[2,1,8], index: 1, kind: input, shape index: {}]
  %s2 = inlined_call_operand.hbm [shape: f32[5,32], index: 2, kind: input, shape index: {}]
  %s3 = inlined_call_operand.vmem [shape: f32[2,32,96], index: 3, kind: input, shape index: {}]
  %s4 = inlined_call_operand.hbm [shape: f32[2,1,96], index: 4, kind: input, shape index: {}]
  %s5 = inlined_call_operand.vmem [shape: f32[2,4,8,32], index: 5, kind: input, shape index: {}]
  %s6 = inlined_call_operand.vmem [shape: f32[2,6,32], index: 6, kind: input, shape index: {}]
  %s7 = inlined_call_operand.vmem [shape: f32[2,32,64], index: 7, kind: input, shape index: {}]
  %s8 = inlined_call_operand.hbm [shape: f32[2,1,64], index: 8, kind: input, shape index: {}]
  %s9 = inlined_call_operand.vmem [shape: f32[2,64,32], index: 9, kind: input, shape index: {}]
  %s10 = inlined_call_operand.vmem [shape: f32[32,32], index: 10, kind: input, shape index: {}]
  %s11 = inlined_call_operand.hbm [shape: f32[16,32], index: 11, kind: output, shape index: {0}]
  %s12 = inlined_call_operand.vmem [shape: f32[2,1], index: 12, kind: output, shape index: {1}]
  %13 = xla_tuple %s11, %s12
  %s14 = sld [smem:[#allocation0]]
  $region82: #{tpu_custom_call.1} parent=0
    _
  %s16 = ssub.s32 1, %s14
  %s17 = scalar_select 0, %s16, %s14
  $region1: #{tpu_custom_call.1} parent=0
    #allocation2 [shape = 'u8[8192]{0}', space=vmem, size = 0x2000, scoped, tag = 'input window, operand 0, single buffered']
    #allocation3 [shape = 's32[1]{0}', space=sflag, size = 0x4, scoped, tag = 'scoped memory for tpu_custom_call.1']
    #allocation4 [shape = 's32[1]{0}', space=sflag, size = 0x4, scoped, tag = 'scoped memory for tpu_custom_call.1']
    #allocation5 [shape = 'u8[1024]{0}', space=vmem, size = 0x400, scoped, tag = 'input window, operand 1, single buffered']
    #allocation6 [shape = 's32[1]{0}', space=sflag, size = 0x4, scoped, tag = 'scoped memory for tpu_custom_call.1']
    #allocation7 [shape = 'u8[4096]{0}', space=vmem, size = 0x1000, scoped, tag = 'input window, operand 2, single buffered']
    #allocation8 [shape = 'u8[1024]{0}', space=vmem, size = 0x400, scoped, tag = 'input window, operand 4, single buffered']
    #allocation9 [shape = 's32[1]{0}', space=sflag, size = 0x4, scoped, tag = 'scoped memory for tpu_custom_call.1']
    #allocation10 [shape = 'u8[1024]{0}', space=vmem, size = 0x400, scoped, tag = 'input window, operand 8, single buffered']
    #allocation11 [shape = 'u8[8192]{0}', space=vmem, size = 0x2000, scoped, tag = 'output window, operand 0, single buffered']
    %18 = vsyncpa [#allocation3], 0
    %19 = vsyncpa [#allocation6], 0
    %20 = vsyncpa [#allocation9], 0
    %21 = vsyncpa [#allocation4], 0
    // Predicated region
    $region2: #{tpu_custom_call.1} parent=1 // pred_check
      _
    $region3: #{tpu_custom_call.1} parent=1 // pred_check_branch
      %23 = sbr.rel (0) target = $region5
    $region4: #{tpu_custom_call.1} parent=1 // pred_region
      %25 = vsyncadd [#allocation3], 0
      %s26 = sshll.u32 %s0, 4
      %s27 = int_to_ptr.hbm [resolvable:$true] %s26
      %s28 = sshll.u32 [#allocation2], 4
      %s29 = int_to_ptr.vmem [resolvable:$true] %s28
      %34 = dma.hbm_to_vmem [thread:$0]  %s27, 256, %s29, [#allocation3], 128, 128, 8
    $region5: #{tpu_custom_call.1} parent=1 // pred_fallthru
      _
    // Predicated region
    $region6: #{tpu_custom_call.1} parent=1 // pred_check
      _
    $region7: #{tpu_custom_call.1} parent=1 // pred_check_branch
      %36 = sbr.rel (0) target = $region9
    $region8: #{tpu_custom_call.1} parent=1 // pred_region
      %38 = vsyncadd [#allocation6], 0
      %s39 = sshll.u32 %s1, 4
      %s40 = int_to_ptr.hbm [resolvable:$true] %s39
      %s41 = sshll.u32 [#allocation5], 4
      %s42 = int_to_ptr.vmem [resolvable:$true] %s41
      %47 = dma.hbm_to_vmem [thread:$0]  %s40, 32, %s42, [#allocation6], 16, 16, 1
    $region9: #{tpu_custom_call.1} parent=1 // pred_fallthru
      _
    // Predicated region
    $region10: #{tpu_custom_call.1} parent=1 // pred_check
      _
    $region11: #{tpu_custom_call.1} parent=1 // pred_check_branch
      %49 = sbr.rel (0) target = $region13
    $region12: #{tpu_custom_call.1} parent=1 // pred_region
      %51 = vsyncadd [#allocation6], 0
      %s53 = sshll.u32 %s2, 4
      %s54 = int_to_ptr.hbm [resolvable:$true] %s53
      %s55 = sshll.u32 [#allocation7], 4
      %s56 = int_to_ptr.vmem [resolvable:$true] %s55
      %58 = dma.hbm_to_vmem [thread:$0]  %s54, 128, %s56, [#allocation6]
    $region13: #{tpu_custom_call.1} parent=1 // pred_fallthru
      _
    // Predicated region
    $region14: #{tpu_custom_call.1} parent=1 // pred_check
      _
    $region15: #{tpu_custom_call.1} parent=1 // pred_check_branch
      %60 = sbr.rel (0) target = $region17
    $region16: #{tpu_custom_call.1} parent=1 // pred_region
      _
    $region17: #{tpu_custom_call.1} parent=1 // pred_fallthru
      _
    // Predicated region
    $region18: #{tpu_custom_call.1} parent=1 // pred_check
      _
    $region19: #{tpu_custom_call.1} parent=1 // pred_check_branch
      %62 = sbr.rel (0) target = $region21
    $region20: #{tpu_custom_call.1} parent=1 // pred_region
      %64 = vsyncadd [#allocation9], 0
      %s65 = sshll.u32 %s4, 4
      %s66 = int_to_ptr.hbm [resolvable:$true] %s65
      %s67 = sshll.u32 [#allocation8], 4
      %s68 = int_to_ptr.vmem [resolvable:$true] %s67
      %73 = dma.hbm_to_vmem [thread:$0]  %s66, 32, %s68, [#allocation9], 16, 16, 1
    $region21: #{tpu_custom_call.1} parent=1 // pred_fallthru
      _
    // Predicated region
    $region22: #{tpu_custom_call.1} parent=1 // pred_check
      _
    $region23: #{tpu_custom_call.1} parent=1 // pred_check_branch
      %75 = sbr.rel (0) target = $region25
    $region24: #{tpu_custom_call.1} parent=1 // pred_region
      _
    $region25: #{tpu_custom_call.1} parent=1 // pred_fallthru
      _
    // Predicated region
    $region26: #{tpu_custom_call.1} parent=1 // pred_check
      _
    $region27: #{tpu_custom_call.1} parent=1 // pred_check_branch
      %77 = sbr.rel (0) target = $region29
    $region28: #{tpu_custom_call.1} parent=1 // pred_region
      _
    $region29: #{tpu_custom_call.1} parent=1 // pred_fallthru
      _
    // Predicated region
    $region30: #{tpu_custom_call.1} parent=1 // pred_check
      _
    $region31: #{tpu_custom_call.1} parent=1 // pred_check_branch
      %79 = sbr.rel (0) target = $region33
    $region32: #{tpu_custom_call.1} parent=1 // pred_region
      _
    $region33: #{tpu_custom_call.1} parent=1 // pred_fallthru
      _
    // Predicated region
    $region34: #{tpu_custom_call.1} parent=1 // pred_check
      _
    $region35: #{tpu_custom_call.1} parent=1 // pred_check_branch
      %81 = sbr.rel (0) target = $region37
    $region36: #{tpu_custom_call.1} parent=1 // pred_region
      %83 = vsyncadd [#allocation9], 0
      %s84 = sshll.u32 %s8, 4
      %s85 = int_to_ptr.hbm [resolvable:$true] %s84
      %s86 = sshll.u32 [#allocation10], 4
      %s87 = int_to_ptr.vmem [resolvable:$true] %s86
      %92 = dma.hbm_to_vmem [thread:$0]  %s85, 32, %s87, [#allocation9], 16, 16, 1
    $region37: #{tpu_custom_call.1} parent=1 // pred_fallthru
      _
    // Predicated region
    $region38: #{tpu_custom_call.1} parent=1 // pred_check
      _
    $region39: #{tpu_custom_call.1} parent=1 // pred_check_branch
      %94 = sbr.rel (0) target = $region41
    $region40: #{tpu_custom_call.1} parent=1 // pred_region
      _
    $region41: #{tpu_custom_call.1} parent=1 // pred_fallthru
      _
    // Predicated region
    $region42: #{tpu_custom_call.1} parent=1 // pred_check
      _
    $region43: #{tpu_custom_call.1} parent=1 // pred_check_branch
      %96 = sbr.rel (0) target = $region45
    $region44: #{tpu_custom_call.1} parent=1 // pred_region
      _
    $region45: #{tpu_custom_call.1} parent=1 // pred_fallthru
      _
    // Predicated region
    $region46: #{tpu_custom_call.1} parent=1 // pred_check
      _
    $region47: #{tpu_custom_call.1} parent=1 // pred_check_branch
      %98 = sbr.rel (0) target = $region49
    $region48: #{tpu_custom_call.1} parent=1 // pred_region
      %100 = dma.done [#allocation3], 256
    $region49: #{tpu_custom_call.1} parent=1 // pred_fallthru
      _
    // Predicated region
    $region50: #{tpu_custom_call.1} parent=1 // pred_check
      _
    $region51: #{tpu_custom_call.1} parent=1 // pred_check_branch
      %102 = sbr.rel (0) target = $region53
    $region52: #{tpu_custom_call.1} parent=1 // pred_region
      %104 = dma.done [#allocation6], 32
    $region53: #{tpu_custom_call.1} parent=1 // pred_fallthru
      _
    // Predicated region
    $region54: #{tpu_custom_call.1} parent=1 // pred_check
      _
    $region55: #{tpu_custom_call.1} parent=1 // pred_check_branch
      %106 = sbr.rel (0) target = $region57
    $region56: #{tpu_custom_call.1} parent=1 // pred_region
      %108 = dma.done [#allocation6], 128
    $region57: #{tpu_custom_call.1} parent=1 // pred_fallthru
      _
    // Predicated region
    $region58: #{tpu_custom_call.1} parent=1 // pred_check
      _
    $region59: #{tpu_custom_call.1} parent=1 // pred_check_branch
      %110 = sbr.rel (0) target = $region61
    $region60: #{tpu_custom_call.1} parent=1 // pred_region
      %112 = dma.done [#allocation9], 32
    $region61: #{tpu_custom_call.1} parent=1 // pred_fallthru
      _
    // Predicated region
    $region62: #{tpu_custom_call.1} parent=1 // pred_check
      _
    $region63: #{tpu_custom_call.1} parent=1 // pred_check_branch
      %114 = sbr.rel (0) target = $region65
    $region64: #{tpu_custom_call.1} parent=1 // pred_region
      %116 = dma.done [#allocation9], 32
    $region65: #{tpu_custom_call.1} parent=1 // pred_fallthru
      _
    %v117 = vld [vmem:[#allocation7] sm:$0x1f]
    %v118 = vld [vmem:[#allocation2] sm:$0xff]
    %v119 = vld [vmem:[#allocation2 + $0x8] sm:$0xff]
    %vm120 = vcmask 261120
    %v121 = vsel %vm120, %v118, 0.0
    %122 = vadd.xlane.f32.xlu0 %v121
    %v123 = vpop.xlane.xlu0 %122
    %v124 = vsel %vm120, %v119, 0.0
    %125 = vadd.xlane.f32.xlu0 %v124
    %v126 = vpop.xlane.xlu0 %125
    %v127 = vrcp.pop 32.0
    %v128 = vmul.f32 32.0, %v127
    %v129 = vsub.f32 1.0, %v128
    %v130 = vmul.f32 %v127, %v129
    %v131 = vadd.f32 %v127, %v130
    %vm132 = vweird.f32 %v127
    %v133 = vsel %vm132, %v127, %v131
    %v134 = vmul.f32 %v123, %v133
    %v135 = vmul.f32 %v126, %v133
    %v136 = vsub.f32 %v118, %v134
    %v137 = vsub.f32 %v119, %v135
    %v138 = vmul.f32 %v136, %v136
    %v139 = vmul.f32 %v137, %v137
    %v140 = vsel %vm120, %v138, 0.0
    %141 = vadd.xlane.f32.xlu0 %v140
    %v142 = vpop.xlane.xlu0 %141
    %v143 = vsel %vm120, %v139, 0.0
    %144 = vadd.xlane.f32.xlu0 %v143
    %v145 = vpop.xlane.xlu0 %144
    %v146 = vmul.f32 %v142, %v133
    %v147 = vmul.f32 %v145, %v133
    %v148 = vadd.f32 %v146, 1e-12
    %v149 = vadd.f32 %v147, 1e-12
    %v150 = vrsqrt.pop %v148
    %v151 = vmul.f32 %v150, %v148
    %v152 = vmul.f32 %v151, %v150
    %v153 = vmul.f32 0.5, %v152
    %v154 = vsub.f32 1.5, %v153
    %v155 = vmul.f32 %v150, %v154
    %vm156 = vweird.f32 %v148
    %vm157 = vweird.f32 %v150
    %vm158 = vmor %vm156, %vm157
    %v159 = vsel %vm158, %v150, %v155
    %v160 = vrsqrt.pop %v149
    %v161 = vmul.f32 %v160, %v149
    %v162 = vmul.f32 %v161, %v160
    %v163 = vmul.f32 0.5, %v162
    %v164 = vsub.f32 1.5, %v163
    %v165 = vmul.f32 %v160, %v164
    %vm166 = vweird.f32 %v149
    %vm167 = vweird.f32 %v160
    %vm168 = vmor %vm166, %vm167
    %v169 = vsel %vm168, %v160, %v165
    %v170 = vmul.f32 %v136, %v159
    %v171 = vmul.f32 %v137, %v169
    %v172 = vperm.slane %v117, 0
    %v173 = vmul.f32 %v170, %v172
    %v174 = vmul.f32 %v171, %v172
    %v175 = vperm.slane %v117, 1
    %v176 = vadd.f32 %v173, %v175
    %v177 = vadd.f32 %v174, %v175
    %v178 = vld [vmem:[#allocation5] sm:$0x1]
    %v179 = vld [vmem:[#allocation5 + $0x1] sm:$0x1]
    %v180 = vsub.f32 1.0, %v178
    %v181 = vsub.f32 1.0, %v179
    %v182 = vmul.f32 %v180, -10000.0
    %v183 = vmul.f32 %v181, -10000.0
    %v184 = vld [vmem:[%s6] sm:$0x3f]
    %v185 = vld [vmem:[%s5] sm:$0xff]
    %v186 = vld [vmem:[%s5 + $0x8] sm:$0xff]
    %v187 = vld [vmem:[%s5 + $0x10] sm:$0xff]
    %v188 = vld [vmem:[%s5 + $0x18] sm:$0xff]
    %v189 = vld [vmem:[%s3] sm:$0xff]
    %v190 = vld [vmem:[%s3 + $0x8] sm:$0xff]
    %v191 = vld [vmem:[%s3 + $0x10] sm:$0xff]
    %v192 = vld [vmem:[%s3 + $0x18] sm:$0xff]
    %v193 = vld [vmem:[#allocation8] sm:$0x1]
    %v195 = vperm.slane %v193, 0
    %v198 = vsel %vm120, %v176, 0
    %v201 = vsel %vm120, %v177, 0
    %203 = vmatpush.msra.mxu0 0.0
    %204 = vmatpush.msra.mxu0 0.0
    %205 = vmatpush.msra.mxu0 0.0
    %206 = vmatpush.msra.mxu0 0.0
    %207 = vmatpush.msra.mxu0 0.0
    %208 = vmatpush.msra.mxu0 0.0
    %209 = vmatpush.msra.mxu0 0.0
    %210 = vmatpush.msra.mxu0 0.0
    %211 = vmatpush.msra.mxu0 0.0
    %212 = vmatpush.msra.mxu0 0.0
    %213 = vmatpush.msra.mxu0 0.0
    %214 = vmatpush.msra.mxu0 0.0
    %215 = vmatpush.msra.mxu0 %v192
    %216 = vmatpush.msra.mxu0 %v191
    %217 = vmatpush.msra.mxu0 %v190
    %218 = vmatpush.msra.mxu0 %v189
    %219 = vmatmul.f32.gmra.mxu0 %v198
    %v220 = vpop.f32.mrf.mxu0
    %v221 = vadd.f32 %v195, %v220
    %222 = vmatmul.f32.gmra.mxu0 %v201
    %v223 = vpop.f32.mrf.mxu0
    %v224 = vadd.f32 %v195, %v223
    %225 = vdwg.mxu0
    %227 = vrot.lane.b32.xlu0 %v221, 96
    %v228 = vpop.permute.xlu0 %227
    %vm229 = vcmask 64512
    %v230 = vsel %vm229, %v221, 0
    %v232 = vsel %vm229, %v228, 0
    %234 = vmatpush.xpose.msra.mxu0 0.0
    %235 = vmatpush.xpose.msra.mxu0 0.0
    %236 = vmatpush.xpose.msra.mxu0 0.0
    %237 = vmatpush.xpose.msra.mxu0 0.0
    %238 = vmatpush.xpose.msra.mxu0 0.0
    %239 = vmatpush.xpose.msra.mxu0 0.0
    %240 = vmatpush.xpose.msra.mxu0 0.0
    %241 = vmatpush.xpose.msra.mxu0 0.0
    %242 = vmatpush.xpose.msra.mxu0 0.0
    %243 = vmatpush.xpose.msra.mxu0 0.0
    %244 = vmatpush.xpose.msra.mxu0 0.0
    %245 = vmatpush.xpose.msra.mxu0 0.0
    %246 = vmatpush.xpose.msra.mxu0 0.0
    %247 = vmatpush.xpose.msra.mxu0 0.0
    %248 = vmatpush.xpose.msra.mxu0 0.0
    %249 = vmatpush.xpose.msra.mxu0 %v232
    %250 = vmatmul.f32.gmra.mxu0 %v230
    %v251 = vpop.f32.mrf.mxu0
    %v252 = vadd.f32 0.0, %v251
    %253 = vdwg.mxu0
    %255 = vrot.lane.b32.xlu0 %v224, 96
    %v256 = vpop.permute.xlu0 %255
    %v257 = vsel %vm229, %v224, 0
    %v259 = vsel %vm229, %v256, 0
    %261 = vmatpush.xpose.msra.mxu0 0.0
    %262 = vmatpush.xpose.msra.mxu0 0.0
    %263 = vmatpush.xpose.msra.mxu0 0.0
    %264 = vmatpush.xpose.msra.mxu0 0.0
    %265 = vmatpush.xpose.msra.mxu0 0.0
    %266 = vmatpush.xpose.msra.mxu0 0.0
    %267 = vmatpush.xpose.msra.mxu0 0.0
    %268 = vmatpush.xpose.msra.mxu0 0.0
    %269 = vmatpush.xpose.msra.mxu0 0.0
    %270 = vmatpush.xpose.msra.mxu0 0.0
    %271 = vmatpush.xpose.msra.mxu0 0.0
    %272 = vmatpush.xpose.msra.mxu0 0.0
    %273 = vmatpush.xpose.msra.mxu0 0.0
    %274 = vmatpush.xpose.msra.mxu0 0.0
    %275 = vmatpush.xpose.msra.mxu0 0.0
    %276 = vmatpush.xpose.msra.mxu0 %v259
    %277 = vmatmul.f32.gmra.mxu0 %v257
    %v278 = vpop.f32.mrf.mxu0
    %v279 = vadd.f32 0.0, %v278
    %280 = vdwg.mxu0
    %v281 = vmul.f32 %v252, 0.35355338
    %v282 = vmul.f32 %v279, 0.35355338
    %v285 = vperm.slane %v182, 0
    %v286 = vperm.slane %v183, 0
    %v289 = vadd.f32 %v281, %v285
    %v290 = vadd.f32 %v282, %v286
    %v291 = vsel %vm229, %v289, -inf
    %292 = vmax.xlane.f32.xlu0 %v291
    %v293 = vpop.xlane.xlu0 %292
    %v294 = vsel %vm229, %v290, -inf
    %295 = vmax.xlane.f32.xlu0 %v294
    %v296 = vpop.xlane.xlu0 %295
    %v297 = vsub.f32 %v289, %v293
    %v298 = vsub.f32 %v290, %v296
    %v299 = vmul.f32 %v297, 1.442695
    %v300 = vpow.pop %v299
    %v301 = vmul.f32 %v298, 1.442695
    %v302 = vpow.pop %v301
    %v303 = vsel %vm229, %v300, 0.0
    %304 = vadd.xlane.f32.xlu0 %v303
    %v305 = vpop.xlane.xlu0 %304
    %v306 = vsel %vm229, %v302, 0.0
    %307 = vadd.xlane.f32.xlu0 %v306
    %v308 = vpop.xlane.xlu0 %307
    %v309 = vrcp.pop %v305
    %v310 = vrcp.pop %v308
    %v311 = vmul.f32 %v300, %v309
    %v312 = vmul.f32 %v302, %v310
    %313 = vrot.lane.b32.xlu0 %v221, 64
    %v314 = vpop.permute.xlu0 %313
    %v317 = vsel %vm229, %v311, 0
    %319 = vmatpush.msra.mxu0 0.0
    %320 = vmatpush.msra.mxu0 0.0
    %321 = vmatpush.msra.mxu0 0.0
    %322 = vmatpush.msra.mxu0 0.0
    %323 = vmatpush.msra.mxu0 0.0
    %324 = vmatpush.msra.mxu0 0.0
    %325 = vmatpush.msra.mxu0 0.0
    %326 = vmatpush.msra.mxu0 0.0
    %327 = vmatpush.msra.mxu0 0.0
    %328 = vmatpush.msra.mxu0 0.0
    %329 = vmatpush.msra.mxu0 0.0
    %330 = vmatpush.msra.mxu0 0.0
    %331 = vmatpush.msra.mxu0 0.0
    %332 = vmatpush.msra.mxu0 0.0
    %333 = vmatpush.msra.mxu0 0.0
    %334 = vmatpush.msra.mxu0 %v314
    %335 = vmatmul.f32.gmra.mxu0 %v317
    %v336 = vpop.f32.mrf.mxu0
    %v337 = vadd.f32 0.0, %v336
    %338 = vdwg.mxu0
    %339 = vrot.lane.b32.xlu0 %v224, 64
    %v340 = vpop.permute.xlu0 %339
    %v343 = vsel %vm229, %v312, 0
    %345 = vmatpush.msra.mxu0 0.0
    %346 = vmatpush.msra.mxu0 0.0
    %347 = vmatpush.msra.mxu0 0.0
    %348 = vmatpush.msra.mxu0 0.0
    %349 = vmatpush.msra.mxu0 0.0
    %350 = vmatpush.msra.mxu0 0.0
    %351 = vmatpush.msra.mxu0 0.0
    %352 = vmatpush.msra.mxu0 0.0
    %353 = vmatpush.msra.mxu0 0.0
    %354 = vmatpush.msra.mxu0 0.0
    %355 = vmatpush.msra.mxu0 0.0
    %356 = vmatpush.msra.mxu0 0.0
    %357 = vmatpush.msra.mxu0 0.0
    %358 = vmatpush.msra.mxu0 0.0
    %359 = vmatpush.msra.mxu0 0.0
    %360 = vmatpush.msra.mxu0 %v340
    %361 = vmatmul.f32.gmra.mxu0 %v343
    %v362 = vpop.f32.mrf.mxu0
    %v363 = vadd.f32 0.0, %v362
    %364 = vdwg.mxu0
    %365 = vrot.lane.b32.xlu0 %v221, 120
    %v366 = vpop.permute.xlu0 %365
    %367 = vrot.lane.b32.xlu0 %v221, 88
    %v368 = vpop.permute.xlu0 %367
    %v369 = vsel %vm229, %v366, 0
    %v371 = vsel %vm229, %v368, 0
    %373 = vmatpush.xpose.msra.mxu0 0.0
    %374 = vmatpush.xpose.msra.mxu0 0.0
    %375 = vmatpush.xpose.msra.mxu0 0.0
    %376 = vmatpush.xpose.msra.mxu0 0.0
    %377 = vmatpush.xpose.msra.mxu0 0.0
    %378 = vmatpush.xpose.msra.mxu0 0.0
    %379 = vmatpush.xpose.msra.mxu0 0.0
    %380 = vmatpush.xpose.msra.mxu0 0.0
    %381 = vmatpush.xpose.msra.mxu0 0.0
    %382 = vmatpush.xpose.msra.mxu0 0.0
    %383 = vmatpush.xpose.msra.mxu0 0.0
    %384 = vmatpush.xpose.msra.mxu0 0.0
    %385 = vmatpush.xpose.msra.mxu0 0.0
    %386 = vmatpush.xpose.msra.mxu0 0.0
    %387 = vmatpush.xpose.msra.mxu0 0.0
    %388 = vmatpush.xpose.msra.mxu0 %v371
    %389 = vmatmul.f32.gmra.mxu0 %v369
    %v390 = vpop.f32.mrf.mxu0
    %v391 = vadd.f32 0.0, %v390
    %392 = vdwg.mxu0
    %393 = vrot.lane.b32.xlu0 %v224, 120
    %v394 = vpop.permute.xlu0 %393
    %395 = vrot.lane.b32.xlu0 %v224, 88
    %v396 = vpop.permute.xlu0 %395
    %v397 = vsel %vm229, %v394, 0
    %v399 = vsel %vm229, %v396, 0
    %401 = vmatpush.xpose.msra.mxu0 0.0
    %402 = vmatpush.xpose.msra.mxu0 0.0
    %403 = vmatpush.xpose.msra.mxu0 0.0
    %404 = vmatpush.xpose.msra.mxu0 0.0
    %405 = vmatpush.xpose.msra.mxu0 0.0
    %406 = vmatpush.xpose.msra.mxu0 0.0
    %407 = vmatpush.xpose.msra.mxu0 0.0
    %408 = vmatpush.xpose.msra.mxu0 0.0
    %409 = vmatpush.xpose.msra.mxu0 0.0
    %410 = vmatpush.xpose.msra.mxu0 0.0
    %411 = vmatpush.xpose.msra.mxu0 0.0
    %412 = vmatpush.xpose.msra.mxu0 0.0
    %413 = vmatpush.xpose.msra.mxu0 0.0
    %414 = vmatpush.xpose.msra.mxu0 0.0
    %415 = vmatpush.xpose.msra.mxu0 0.0
    %416 = vmatpush.xpose.msra.mxu0 %v399
    %417 = vmatmul.f32.gmra.mxu0 %v397
    %v418 = vpop.f32.mrf.mxu0
    %v419 = vadd.f32 0.0, %v418
    %420 = vdwg.mxu0
    %v421 = vmul.f32 %v391, 0.35355338
    %v422 = vmul.f32 %v419, 0.35355338
    %v423 = vadd.f32 %v421, %v285
    %v424 = vadd.f32 %v422, %v286
    %v425 = vsel %vm229, %v423, -inf
    %426 = vmax.xlane.f32.xlu0 %v425
    %v427 = vpop.xlane.xlu0 %426
    %v428 = vsel %vm229, %v424, -inf
    %429 = vmax.xlane.f32.xlu0 %v428
    %v430 = vpop.xlane.xlu0 %429
    %v431 = vsub.f32 %v423, %v427
    %v432 = vsub.f32 %v424, %v430
    %v433 = vmul.f32 %v431, 1.442695
    %v434 = vpow.pop %v433
    %v435 = vmul.f32 %v432, 1.442695
    %v436 = vpow.pop %v435
    %v437 = vsel %vm229, %v434, 0.0
    %438 = vadd.xlane.f32.xlu0 %v437
    %v439 = vpop.xlane.xlu0 %438
    %v440 = vsel %vm229, %v436, 0.0
    %441 = vadd.xlane.f32.xlu0 %v440
    %v442 = vpop.xlane.xlu0 %441
    %v443 = vrcp.pop %v439
    %v444 = vrcp.pop %v442
    %v445 = vmul.f32 %v434, %v443
    %v446 = vmul.f32 %v436, %v444
    %447 = vrot.lane.b32.xlu0 %v221, 56
    %v448 = vpop.permute.xlu0 %447
    %v451 = vsel %vm229, %v445, 0
    %453 = vmatpush.msra.mxu0 0.0
    %454 = vmatpush.msra.mxu0 0.0
    %455 = vmatpush.msra.mxu0 0.0
    %456 = vmatpush.msra.mxu0 0.0
    %457 = vmatpush.msra.mxu0 0.0
    %458 = vmatpush.msra.mxu0 0.0
    %459 = vmatpush.msra.mxu0 0.0
    %460 = vmatpush.msra.mxu0 0.0
    %461 = vmatpush.msra.mxu0 0.0
    %462 = vmatpush.msra.mxu0 0.0
    %463 = vmatpush.msra.mxu0 0.0
    %464 = vmatpush.msra.mxu0 0.0
    %465 = vmatpush.msra.mxu0 0.0
    %466 = vmatpush.msra.mxu0 0.0
    %467 = vmatpush.msra.mxu0 0.0
    %468 = vmatpush.msra.mxu0 %v448
    %469 = vmatmul.f32.gmra.mxu0 %v451
    %v470 = vpop.f32.mrf.mxu0
    %v471 = vadd.f32 0.0, %v470
    %472 = vdwg.mxu0
    %473 = vrot.lane.b32.xlu0 %v224, 56
    %v474 = vpop.permute.xlu0 %473
    %v477 = vsel %vm229, %v446, 0
    %479 = vmatpush.msra.mxu0 0.0
    %480 = vmatpush.msra.mxu0 0.0
    %481 = vmatpush.msra.mxu0 0.0
    %482 = vmatpush.msra.mxu0 0.0
    %483 = vmatpush.msra.mxu0 0.0
    %484 = vmatpush.msra.mxu0 0.0
    %485 = vmatpush.msra.mxu0 0.0
    %486 = vmatpush.msra.mxu0 0.0
    %487 = vmatpush.msra.mxu0 0.0
    %488 = vmatpush.msra.mxu0 0.0
    %489 = vmatpush.msra.mxu0 0.0
    %490 = vmatpush.msra.mxu0 0.0
    %491 = vmatpush.msra.mxu0 0.0
    %492 = vmatpush.msra.mxu0 0.0
    %493 = vmatpush.msra.mxu0 0.0
    %494 = vmatpush.msra.mxu0 %v474
    %495 = vmatmul.f32.gmra.mxu0 %v477
    %v496 = vpop.f32.mrf.mxu0
    %v497 = vadd.f32 0.0, %v496
    %498 = vdwg.mxu0
    %v500 = vsel %vm229, %v471, 0
    %v503 = vsel %vm229, %v497, 0
    %505 = vmatpush.msra.mxu0 0.0
    %506 = vmatpush.msra.mxu0 0.0
    %507 = vmatpush.msra.mxu0 0.0
    %508 = vmatpush.msra.mxu0 0.0
    %509 = vmatpush.msra.mxu0 0.0
    %510 = vmatpush.msra.mxu0 0.0
    %511 = vmatpush.msra.mxu0 0.0
    %512 = vmatpush.msra.mxu0 0.0
    %513 = vmatpush.msra.mxu0 0.0
    %514 = vmatpush.msra.mxu0 0.0
    %515 = vmatpush.msra.mxu0 0.0
    %516 = vmatpush.msra.mxu0 0.0
    %517 = vmatpush.msra.mxu0 0.0
    %518 = vmatpush.msra.mxu0 0.0
    %519 = vmatpush.msra.mxu0 0.0
    %520 = vmatpush.msra.mxu0 %v186
    %521 = vmatmul.f32.gmra.mxu0 %v500
    %v522 = vpop.f32.mrf.mxu0
    %v523 = vadd.f32 0.0, %v522
    %524 = vmatmul.f32.gmra.mxu0 %v503
    %v525 = vpop.f32.mrf.mxu0
    %v526 = vadd.f32 0.0, %v525
    %527 = vdwg.mxu0
    %v529 = vsel %vm229, %v337, 0
    %v532 = vsel %vm229, %v363, 0
    %534 = vmatpush.msra.mxu0 0.0
    %535 = vmatpush.msra.mxu0 0.0
    %536 = vmatpush.msra.mxu0 0.0
    %537 = vmatpush.msra.mxu0 0.0
    %538 = vmatpush.msra.mxu0 0.0
    %539 = vmatpush.msra.mxu0 0.0
    %540 = vmatpush.msra.mxu0 0.0
    %541 = vmatpush.msra.mxu0 0.0
    %542 = vmatpush.msra.mxu0 0.0
    %543 = vmatpush.msra.mxu0 0.0
    %544 = vmatpush.msra.mxu0 0.0
    %545 = vmatpush.msra.mxu0 0.0
    %546 = vmatpush.msra.mxu0 0.0
    %547 = vmatpush.msra.mxu0 0.0
    %548 = vmatpush.msra.mxu0 0.0
    %549 = vmatpush.msra.mxu0 %v185
    %550 = vmatmul.f32.gmra.mxu0 %v529
    %v551 = vpop.f32.mrf.mxu0
    %v552 = vadd.f32 %v523, %v551
    %553 = vmatmul.f32.gmra.mxu0 %v532
    %v554 = vpop.f32.mrf.mxu0
    %v555 = vadd.f32 %v526, %v554
    %556 = vdwg.mxu0
    %557 = vrot.lane.b32.xlu0 %v221, 112
    %v558 = vpop.permute.xlu0 %557
    %559 = vrot.lane.b32.xlu0 %v221, 80
    %v560 = vpop.permute.xlu0 %559
    %v561 = vsel %vm229, %v558, 0
    %v563 = vsel %vm229, %v560, 0
    %565 = vmatpush.xpose.msra.mxu0 0.0
    %566 = vmatpush.xpose.msra.mxu0 0.0
    %567 = vmatpush.xpose.msra.mxu0 0.0
    %568 = vmatpush.xpose.msra.mxu0 0.0
    %569 = vmatpush.xpose.msra.mxu0 0.0
    %570 = vmatpush.xpose.msra.mxu0 0.0
    %571 = vmatpush.xpose.msra.mxu0 0.0
    %572 = vmatpush.xpose.msra.mxu0 0.0
    %573 = vmatpush.xpose.msra.mxu0 0.0
    %574 = vmatpush.xpose.msra.mxu0 0.0
    %575 = vmatpush.xpose.msra.mxu0 0.0
    %576 = vmatpush.xpose.msra.mxu0 0.0
    %577 = vmatpush.xpose.msra.mxu0 0.0
    %578 = vmatpush.xpose.msra.mxu0 0.0
    %579 = vmatpush.xpose.msra.mxu0 0.0
    %580 = vmatpush.xpose.msra.mxu0 %v563
    %581 = vmatmul.f32.gmra.mxu0 %v561
    %v582 = vpop.f32.mrf.mxu0
    %v583 = vadd.f32 0.0, %v582
    %584 = vdwg.mxu0
    %585 = vrot.lane.b32.xlu0 %v224, 112
    %v586 = vpop.permute.xlu0 %585
    %587 = vrot.lane.b32.xlu0 %v224, 80
    %v588 = vpop.permute.xlu0 %587
    %v589 = vsel %vm229, %v586, 0
    %v591 = vsel %vm229, %v588, 0
    %593 = vmatpush.xpose.msra.mxu0 0.0
    %594 = vmatpush.xpose.msra.mxu0 0.0
    %595 = vmatpush.xpose.msra.mxu0 0.0
    %596 = vmatpush.xpose.msra.mxu0 0.0
    %597 = vmatpush.xpose.msra.mxu0 0.0
    %598 = vmatpush.xpose.msra.mxu0 0.0
    %599 = vmatpush.xpose.msra.mxu0 0.0
    %600 = vmatpush.xpose.msra.mxu0 0.0
    %601 = vmatpush.xpose.msra.mxu0 0.0
    %602 = vmatpush.xpose.msra.mxu0 0.0
    %603 = vmatpush.xpose.msra.mxu0 0.0
    %604 = vmatpush.xpose.msra.mxu0 0.0
    %605 = vmatpush.xpose.msra.mxu0 0.0
    %606 = vmatpush.xpose.msra.mxu0 0.0
    %607 = vmatpush.xpose.msra.mxu0 0.0
    %608 = vmatpush.xpose.msra.mxu0 %v591
    %609 = vmatmul.f32.gmra.mxu0 %v589
    %v610 = vpop.f32.mrf.mxu0
    %v611 = vadd.f32 0.0, %v610
    %612 = vdwg.mxu0
    %v613 = vmul.f32 %v583, 0.35355338
    %v614 = vmul.f32 %v611, 0.35355338
    %v615 = vadd.f32 %v613, %v285
    %v616 = vadd.f32 %v614, %v286
    %v617 = vsel %vm229, %v615, -inf
    %618 = vmax.xlane.f32.xlu0 %v617
    %v619 = vpop.xlane.xlu0 %618
    %v620 = vsel %vm229, %v616, -inf
    %621 = vmax.xlane.f32.xlu0 %v620
    %v622 = vpop.xlane.xlu0 %621
    %v623 = vsub.f32 %v615, %v619
    %v624 = vsub.f32 %v616, %v622
    %v625 = vmul.f32 %v623, 1.442695
    %v626 = vpow.pop %v625
    %v627 = vmul.f32 %v624, 1.442695
    %v628 = vpow.pop %v627
    %v629 = vsel %vm229, %v626, 0.0
    %630 = vadd.xlane.f32.xlu0 %v629
    %v631 = vpop.xlane.xlu0 %630
    %v632 = vsel %vm229, %v628, 0.0
    %633 = vadd.xlane.f32.xlu0 %v632
    %v634 = vpop.xlane.xlu0 %633
    %v635 = vrcp.pop %v631
    %v636 = vrcp.pop %v634
    %v637 = vmul.f32 %v626, %v635
    %v638 = vmul.f32 %v628, %v636
    %639 = vrot.lane.b32.xlu0 %v221, 48
    %v640 = vpop.permute.xlu0 %639
    %v643 = vsel %vm229, %v637, 0
    %645 = vmatpush.msra.mxu0 0.0
    %646 = vmatpush.msra.mxu0 0.0
    %647 = vmatpush.msra.mxu0 0.0
    %648 = vmatpush.msra.mxu0 0.0
    %649 = vmatpush.msra.mxu0 0.0
    %650 = vmatpush.msra.mxu0 0.0
    %651 = vmatpush.msra.mxu0 0.0
    %652 = vmatpush.msra.mxu0 0.0
    %653 = vmatpush.msra.mxu0 0.0
    %654 = vmatpush.msra.mxu0 0.0
    %655 = vmatpush.msra.mxu0 0.0
    %656 = vmatpush.msra.mxu0 0.0
    %657 = vmatpush.msra.mxu0 0.0
    %658 = vmatpush.msra.mxu0 0.0
    %659 = vmatpush.msra.mxu0 0.0
    %660 = vmatpush.msra.mxu0 %v640
    %661 = vmatmul.f32.gmra.mxu0 %v643
    %v662 = vpop.f32.mrf.mxu0
    %v663 = vadd.f32 0.0, %v662
    %664 = vdwg.mxu0
    %665 = vrot.lane.b32.xlu0 %v224, 48
    %v666 = vpop.permute.xlu0 %665
    %v669 = vsel %vm229, %v638, 0
    %671 = vmatpush.msra.mxu0 0.0
    %672 = vmatpush.msra.mxu0 0.0
    %673 = vmatpush.msra.mxu0 0.0
    %674 = vmatpush.msra.mxu0 0.0
    %675 = vmatpush.msra.mxu0 0.0
    %676 = vmatpush.msra.mxu0 0.0
    %677 = vmatpush.msra.mxu0 0.0
    %678 = vmatpush.msra.mxu0 0.0
    %679 = vmatpush.msra.mxu0 0.0
    %680 = vmatpush.msra.mxu0 0.0
    %681 = vmatpush.msra.mxu0 0.0
    %682 = vmatpush.msra.mxu0 0.0
    %683 = vmatpush.msra.mxu0 0.0
    %684 = vmatpush.msra.mxu0 0.0
    %685 = vmatpush.msra.mxu0 0.0
    %686 = vmatpush.msra.mxu0 %v666
    %687 = vmatmul.f32.gmra.mxu0 %v669
    %v688 = vpop.f32.mrf.mxu0
    %v689 = vadd.f32 0.0, %v688
    %690 = vdwg.mxu0
    %v692 = vsel %vm229, %v663, 0
    %v695 = vsel %vm229, %v689, 0
    %697 = vmatpush.msra.mxu0 0.0
    %698 = vmatpush.msra.mxu0 0.0
    %699 = vmatpush.msra.mxu0 0.0
    %700 = vmatpush.msra.mxu0 0.0
    %701 = vmatpush.msra.mxu0 0.0
    %702 = vmatpush.msra.mxu0 0.0
    %703 = vmatpush.msra.mxu0 0.0
    %704 = vmatpush.msra.mxu0 0.0
    %705 = vmatpush.msra.mxu0 0.0
    %706 = vmatpush.msra.mxu0 0.0
    %707 = vmatpush.msra.mxu0 0.0
    %708 = vmatpush.msra.mxu0 0.0
    %709 = vmatpush.msra.mxu0 0.0
    %710 = vmatpush.msra.mxu0 0.0
    %711 = vmatpush.msra.mxu0 0.0
    %712 = vmatpush.msra.mxu0 %v187
    %713 = vmatmul.f32.gmra.mxu0 %v692
    %v714 = vpop.f32.mrf.mxu0
    %v715 = vadd.f32 0.0, %v714
    %716 = vmatmul.f32.gmra.mxu0 %v695
    %v717 = vpop.f32.mrf.mxu0
    %v718 = vadd.f32 0.0, %v717
    %719 = vdwg.mxu0
    %v720 = vadd.f32 %v552, %v715
    %v721 = vadd.f32 %v555, %v718
    %722 = vrot.lane.b32.xlu0 %v221, 104
    %v723 = vpop.permute.xlu0 %722
    %724 = vrot.lane.b32.xlu0 %v221, 72
    %v725 = vpop.permute.xlu0 %724
    %v726 = vsel %vm229, %v723, 0
    %v728 = vsel %vm229, %v725, 0
    %730 = vmatpush.xpose.msra.mxu0 0.0
    %731 = vmatpush.xpose.msra.mxu0 0.0
    %732 = vmatpush.xpose.msra.mxu0 0.0
    %733 = vmatpush.xpose.msra.mxu0 0.0
    %734 = vmatpush.xpose.msra.mxu0 0.0
    %735 = vmatpush.xpose.msra.mxu0 0.0
    %736 = vmatpush.xpose.msra.mxu0 0.0
    %737 = vmatpush.xpose.msra.mxu0 0.0
    %738 = vmatpush.xpose.msra.mxu0 0.0
    %739 = vmatpush.xpose.msra.mxu0 0.0
    %740 = vmatpush.xpose.msra.mxu0 0.0
    %741 = vmatpush.xpose.msra.mxu0 0.0
    %742 = vmatpush.xpose.msra.mxu0 0.0
    %743 = vmatpush.xpose.msra.mxu0 0.0
    %744 = vmatpush.xpose.msra.mxu0 0.0
    %745 = vmatpush.xpose.msra.mxu0 %v728
    %746 = vmatmul.f32.gmra.mxu0 %v726
    %v747 = vpop.f32.mrf.mxu0
    %v748 = vadd.f32 0.0, %v747
    %749 = vdwg.mxu0
    %750 = vrot.lane.b32.xlu0 %v224, 104
    %v751 = vpop.permute.xlu0 %750
    %752 = vrot.lane.b32.xlu0 %v224, 72
    %v753 = vpop.permute.xlu0 %752
    %v754 = vsel %vm229, %v751, 0
    %v756 = vsel %vm229, %v753, 0
    %758 = vmatpush.xpose.msra.mxu0 0.0
    %759 = vmatpush.xpose.msra.mxu0 0.0
    %760 = vmatpush.xpose.msra.mxu0 0.0
    %761 = vmatpush.xpose.msra.mxu0 0.0
    %762 = vmatpush.xpose.msra.mxu0 0.0
    %763 = vmatpush.xpose.msra.mxu0 0.0
    %764 = vmatpush.xpose.msra.mxu0 0.0
    %765 = vmatpush.xpose.msra.mxu0 0.0
    %766 = vmatpush.xpose.msra.mxu0 0.0
    %767 = vmatpush.xpose.msra.mxu0 0.0
    %768 = vmatpush.xpose.msra.mxu0 0.0
    %769 = vmatpush.xpose.msra.mxu0 0.0
    %770 = vmatpush.xpose.msra.mxu0 0.0
    %771 = vmatpush.xpose.msra.mxu0 0.0
    %772 = vmatpush.xpose.msra.mxu0 0.0
    %773 = vmatpush.xpose.msra.mxu0 %v756
    %774 = vmatmul.f32.gmra.mxu0 %v754
    %v775 = vpop.f32.mrf.mxu0
    %v776 = vadd.f32 0.0, %v775
    %777 = vdwg.mxu0
    %v778 = vmul.f32 %v748, 0.35355338
    %v779 = vmul.f32 %v776, 0.35355338
    %v780 = vadd.f32 %v778, %v285
    %v781 = vadd.f32 %v779, %v286
    %v782 = vsel %vm229, %v780, -inf
    %783 = vmax.xlane.f32.xlu0 %v782
    %v784 = vpop.xlane.xlu0 %783
    %v785 = vsel %vm229, %v781, -inf
    %786 = vmax.xlane.f32.xlu0 %v785
    %v787 = vpop.xlane.xlu0 %786
    %v788 = vsub.f32 %v780, %v784
    %v789 = vsub.f32 %v781, %v787
    %v790 = vmul.f32 %v788, 1.442695
    %v791 = vpow.pop %v790
    %v792 = vmul.f32 %v789, 1.442695
    %v793 = vpow.pop %v792
    %v794 = vsel %vm229, %v791, 0.0
    %795 = vadd.xlane.f32.xlu0 %v794
    %v796 = vpop.xlane.xlu0 %795
    %v797 = vsel %vm229, %v793, 0.0
    %798 = vadd.xlane.f32.xlu0 %v797
    %v799 = vpop.xlane.xlu0 %798
    %v800 = vrcp.pop %v796
    %v801 = vrcp.pop %v799
    %v802 = vmul.f32 %v791, %v800
    %v803 = vmul.f32 %v793, %v801
    %804 = vrot.lane.b32.xlu0 %v221, 40
    %v805 = vpop.permute.xlu0 %804
    %v808 = vsel %vm229, %v802, 0
    %810 = vmatpush.msra.mxu0 0.0
    %811 = vmatpush.msra.mxu0 0.0
    %812 = vmatpush.msra.mxu0 0.0
    %813 = vmatpush.msra.mxu0 0.0
    %814 = vmatpush.msra.mxu0 0.0
    %815 = vmatpush.msra.mxu0 0.0
    %816 = vmatpush.msra.mxu0 0.0
    %817 = vmatpush.msra.mxu0 0.0
    %818 = vmatpush.msra.mxu0 0.0
    %819 = vmatpush.msra.mxu0 0.0
    %820 = vmatpush.msra.mxu0 0.0
    %821 = vmatpush.msra.mxu0 0.0
    %822 = vmatpush.msra.mxu0 0.0
    %823 = vmatpush.msra.mxu0 0.0
    %824 = vmatpush.msra.mxu0 0.0
    %825 = vmatpush.msra.mxu0 %v805
    %826 = vmatmul.f32.gmra.mxu0 %v808
    %v827 = vpop.f32.mrf.mxu0
    %v828 = vadd.f32 0.0, %v827
    %829 = vdwg.mxu0
    %830 = vrot.lane.b32.xlu0 %v224, 40
    %v831 = vpop.permute.xlu0 %830
    %v834 = vsel %vm229, %v803, 0
    %836 = vmatpush.msra.mxu0 0.0
    %837 = vmatpush.msra.mxu0 0.0
    %838 = vmatpush.msra.mxu0 0.0
    %839 = vmatpush.msra.mxu0 0.0
    %840 = vmatpush.msra.mxu0 0.0
    %841 = vmatpush.msra.mxu0 0.0
    %842 = vmatpush.msra.mxu0 0.0
    %843 = vmatpush.msra.mxu0 0.0
    %844 = vmatpush.msra.mxu0 0.0
    %845 = vmatpush.msra.mxu0 0.0
    %846 = vmatpush.msra.mxu0 0.0
    %847 = vmatpush.msra.mxu0 0.0
    %848 = vmatpush.msra.mxu0 0.0
    %849 = vmatpush.msra.mxu0 0.0
    %850 = vmatpush.msra.mxu0 0.0
    %851 = vmatpush.msra.mxu0 %v831
    %852 = vmatmul.f32.gmra.mxu0 %v834
    %v853 = vpop.f32.mrf.mxu0
    %v854 = vadd.f32 0.0, %v853
    %855 = vdwg.mxu0
    %v857 = vsel %vm229, %v828, 0
    %v860 = vsel %vm229, %v854, 0
    %862 = vmatpush.msra.mxu0 0.0
    %863 = vmatpush.msra.mxu0 0.0
    %864 = vmatpush.msra.mxu0 0.0
    %865 = vmatpush.msra.mxu0 0.0
    %866 = vmatpush.msra.mxu0 0.0
    %867 = vmatpush.msra.mxu0 0.0
    %868 = vmatpush.msra.mxu0 0.0
    %869 = vmatpush.msra.mxu0 0.0
    %870 = vmatpush.msra.mxu0 0.0
    %871 = vmatpush.msra.mxu0 0.0
    %872 = vmatpush.msra.mxu0 0.0
    %873 = vmatpush.msra.mxu0 0.0
    %874 = vmatpush.msra.mxu0 0.0
    %875 = vmatpush.msra.mxu0 0.0
    %876 = vmatpush.msra.mxu0 0.0
    %877 = vmatpush.msra.mxu0 %v188
    %878 = vmatmul.f32.gmra.mxu0 %v857
    %v879 = vpop.f32.mrf.mxu0
    %v880 = vadd.f32 0.0, %v879
    %881 = vmatmul.f32.gmra.mxu0 %v860
    %v882 = vpop.f32.mrf.mxu0
    %v883 = vadd.f32 0.0, %v882
    %884 = vdwg.mxu0
    %v885 = vadd.f32 %v720, %v880
    %v886 = vadd.f32 %v721, %v883
    %v887 = vperm.slane %v184, 0
    %v888 = vadd.f32 %v885, %v887
    %v889 = vadd.f32 %v886, %v887
    %v890 = vadd.f32 %v888, %v176
    %v891 = vadd.f32 %v889, %v177
    %v892 = vsel %vm120, %v890, 0.0
    %893 = vadd.xlane.f32.xlu0 %v892
    %v894 = vpop.xlane.xlu0 %893
    %v895 = vsel %vm120, %v891, 0.0
    %896 = vadd.xlane.f32.xlu0 %v895
    %v897 = vpop.xlane.xlu0 %896
    %v898 = vmul.f32 %v894, %v133
    %v899 = vmul.f32 %v897, %v133
    %v900 = vsub.f32 %v890, %v898
    %v901 = vsub.f32 %v891, %v899
    %v902 = vmul.f32 %v900, %v900
    %v903 = vmul.f32 %v901, %v901
    %v904 = vsel %vm120, %v902, 0.0
    %905 = vadd.xlane.f32.xlu0 %v904
    %v906 = vpop.xlane.xlu0 %905
    %v907 = vsel %vm120, %v903, 0.0
    %908 = vadd.xlane.f32.xlu0 %v907
    %v909 = vpop.xlane.xlu0 %908
    %v910 = vmul.f32 %v906, %v133
    %v911 = vmul.f32 %v909, %v133
    %v912 = vadd.f32 %v910, 1e-12
    %v913 = vadd.f32 %v911, 1e-12
    %v914 = vrsqrt.pop %v912
    %v915 = vmul.f32 %v914, %v912
    %v916 = vmul.f32 %v915, %v914
    %v917 = vmul.f32 0.5, %v916
    %v918 = vsub.f32 1.5, %v917
    %v919 = vmul.f32 %v914, %v918
    %vm920 = vweird.f32 %v912
    %vm921 = vweird.f32 %v914
    %vm922 = vmor %vm920, %vm921
    %v923 = vsel %vm922, %v914, %v919
    %v924 = vrsqrt.pop %v913
    %v925 = vmul.f32 %v924, %v913
    %v926 = vmul.f32 %v925, %v924
    %v927 = vmul.f32 0.5, %v926
    %v928 = vsub.f32 1.5, %v927
    %v929 = vmul.f32 %v924, %v928
    %vm930 = vweird.f32 %v913
    %vm931 = vweird.f32 %v924
    %vm932 = vmor %vm930, %vm931
    %v933 = vsel %vm932, %v924, %v929
    %v934 = vmul.f32 %v900, %v923
    %v935 = vmul.f32 %v901, %v933
    %v936 = vperm.slane %v184, 1
    %v937 = vmul.f32 %v934, %v936
    %v938 = vmul.f32 %v935, %v936
    %v939 = vperm.slane %v184, 2
    %v940 = vadd.f32 %v937, %v939
    %v941 = vadd.f32 %v938, %v939
    %v942 = vld [vmem:[%s7] sm:$0xff]
    %v943 = vld [vmem:[%s7 + $0x8] sm:$0xff]
    %v944 = vld [vmem:[%s7 + $0x10] sm:$0xff]
    %v945 = vld [vmem:[%s7 + $0x18] sm:$0xff]
    %v946 = vld [vmem:[#allocation10] sm:$0x1]
    %v948 = vperm.slane %v946, 0
    %v951 = vsel %vm120, %v940, 0
    %v954 = vsel %vm120, %v941, 0
    %956 = vmatpush.msra.mxu0 0.0
    %957 = vmatpush.msra.mxu0 0.0
    %958 = vmatpush.msra.mxu0 0.0
    %959 = vmatpush.msra.mxu0 0.0
    %960 = vmatpush.msra.mxu0 0.0
    %961 = vmatpush.msra.mxu0 0.0
    %962 = vmatpush.msra.mxu0 0.0
    %963 = vmatpush.msra.mxu0 0.0
    %964 = vmatpush.msra.mxu0 0.0
    %965 = vmatpush.msra.mxu0 0.0
    %966 = vmatpush.msra.mxu0 0.0
    %967 = vmatpush.msra.mxu0 0.0
    %968 = vmatpush.msra.mxu0 %v945
    %969 = vmatpush.msra.mxu0 %v944
    %970 = vmatpush.msra.mxu0 %v943
    %971 = vmatpush.msra.mxu0 %v942
    %972 = vmatmul.f32.gmra.mxu0 %v951
    %v973 = vpop.f32.mrf.mxu0
    %v974 = vadd.f32 %v948, %v973
    %975 = vmatmul.f32.gmra.mxu0 %v954
    %v976 = vpop.f32.mrf.mxu0
    %v977 = vadd.f32 %v948, %v976
    %978 = vdwg.mxu0
    %v979 = vmul.f32 %v974, 0.5
    %v980 = vmul.f32 %v977, 0.5
    %v981 = vmul.f32 %v974, 0.044715
    %v982 = vmul.f32 %v977, 0.044715
    %v983 = vmul.f32 %v981, %v974
    %v984 = vmul.f32 %v982, %v977
    %v985 = vmul.f32 %v983, %v974
    %v986 = vmul.f32 %v984, %v977
    %v987 = vadd.f32 %v974, %v985
    %v988 = vadd.f32 %v977, %v986
    %v989 = vmul.f32 %v987, 0.7978846
    %v990 = vmul.f32 %v988, 0.7978846
    %v991 = vtanh.pop %v989
    %v992 = vtanh.pop %v990
    %v993 = vadd.f32 %v991, 1.0
    %v994 = vadd.f32 %v992, 1.0
    %v995 = vmul.f32 %v979, %v993
    %v996 = vmul.f32 %v980, %v994
    %v997 = vld [vmem:[%s9] sm:$0xff]
    %v998 = vld [vmem:[%s9 + $0x8] sm:$0xff]
    %v999 = vld [vmem:[%s9 + $0x10] sm:$0xff]
    %v1000 = vld [vmem:[%s9 + $0x18] sm:$0xff]
    %v1001 = vld [vmem:[%s9 + $0x20] sm:$0xff]
    %v1002 = vld [vmem:[%s9 + $0x28] sm:$0xff]
    %v1003 = vld [vmem:[%s9 + $0x30] sm:$0xff]
    %v1004 = vld [vmem:[%s9 + $0x38] sm:$0xff]
    %v1005 = vperm.slane %v184, 3
    %vm1006 = vcmask 523264
    %v1008 = vsel %vm1006, %v995, 0
    %v1011 = vsel %vm1006, %v996, 0
    %1013 = vmatpush.msra.mxu0 0.0
    %1014 = vmatpush.msra.mxu0 0.0
    %1015 = vmatpush.msra.mxu0 0.0
    %1016 = vmatpush.msra.mxu0 0.0
    %1017 = vmatpush.msra.mxu0 0.0
    %1018 = vmatpush.msra.mxu0 0.0
    %1019 = vmatpush.msra.mxu0 0.0
    %1020 = vmatpush.msra.mxu0 0.0
    %1021 = vmatpush.msra.mxu0 %v1004
    %1022 = vmatpush.msra.mxu0 %v1003
    %1023 = vmatpush.msra.mxu0 %v1002
    %1024 = vmatpush.msra.mxu0 %v1001
    %1025 = vmatpush.msra.mxu0 %v1000
    %1026 = vmatpush.msra.mxu0 %v999
    %1027 = vmatpush.msra.mxu0 %v998
    %1028 = vmatpush.msra.mxu0 %v997
    %1029 = vmatmul.f32.gmra.mxu0 %v1008
    %v1030 = vpop.f32.mrf.mxu0
    %v1031 = vadd.f32 %v1005, %v1030
    %1032 = vmatmul.f32.gmra.mxu0 %v1011
    %v1033 = vpop.f32.mrf.mxu0
    %v1034 = vadd.f32 %v1005, %v1033
    %1035 = vdwg.mxu0
    %v1036 = vadd.f32 %v1031, %v940
    %v1037 = vadd.f32 %v1034, %v941
    %v1038 = vsel %vm120, %v1036, 0.0
    %1039 = vadd.xlane.f32.xlu0 %v1038
    %v1040 = vpop.xlane.xlu0 %1039
    %v1041 = vsel %vm120, %v1037, 0.0
    %1042 = vadd.xlane.f32.xlu0 %v1041
    %v1043 = vpop.xlane.xlu0 %1042
    %v1044 = vmul.f32 %v1040, %v133
    %v1045 = vmul.f32 %v1043, %v133
    %v1046 = vsub.f32 %v1036, %v1044
    %v1047 = vsub.f32 %v1037, %v1045
    %v1048 = vmul.f32 %v1046, %v1046
    %v1049 = vmul.f32 %v1047, %v1047
    %v1050 = vsel %vm120, %v1048, 0.0
    %1051 = vadd.xlane.f32.xlu0 %v1050
    %v1052 = vpop.xlane.xlu0 %1051
    %v1053 = vsel %vm120, %v1049, 0.0
    %1054 = vadd.xlane.f32.xlu0 %v1053
    %v1055 = vpop.xlane.xlu0 %1054
    %v1056 = vmul.f32 %v1052, %v133
    %v1057 = vmul.f32 %v1055, %v133
    %v1058 = vadd.f32 %v1056, 1e-12
    %v1059 = vadd.f32 %v1057, 1e-12
    %v1060 = vrsqrt.pop %v1058
    %v1061 = vmul.f32 %v1060, %v1058
    %v1062 = vmul.f32 %v1061, %v1060
    %v1063 = vmul.f32 0.5, %v1062
    %v1064 = vsub.f32 1.5, %v1063
    %v1065 = vmul.f32 %v1060, %v1064
    %vm1066 = vweird.f32 %v1058
    %vm1067 = vweird.f32 %v1060
    %vm1068 = vmor %vm1066, %vm1067
    %v1069 = vsel %vm1068, %v1060, %v1065
    %v1070 = vrsqrt.pop %v1059
    %v1071 = vmul.f32 %v1070, %v1059
    %v1072 = vmul.f32 %v1071, %v1070
    %v1073 = vmul.f32 0.5, %v1072
    %v1074 = vsub.f32 1.5, %v1073
    %v1075 = vmul.f32 %v1070, %v1074
    %vm1076 = vweird.f32 %v1059
    %vm1077 = vweird.f32 %v1070
    %vm1078 = vmor %vm1076, %vm1077
    %v1079 = vsel %vm1078, %v1070, %v1075
    %v1080 = vmul.f32 %v1046, %v1069
    %v1081 = vmul.f32 %v1047, %v1079
    %v1082 = vperm.slane %v184, 4
    %v1083 = vmul.f32 %v1080, %v1082
    %v1084 = vmul.f32 %v1081, %v1082
    %v1085 = vperm.slane %v184, 5
    %v1086 = vadd.f32 %v1083, %v1085
    %v1087 = vadd.f32 %v1084, %v1085
    %s1088 = scalar_lea.vmem %s6, 8
    %v1089 = vld [vmem:[%s1088] sm:$0x3f]
    %s1090 = scalar_lea.vmem %s5, 32
    %v1091 = vld [vmem:[%s1090] sm:$0xff]
    %v1092 = vld [vmem:[%s1090 + $0x8] sm:$0xff]
    %v1093 = vld [vmem:[%s1090 + $0x10] sm:$0xff]
    %v1094 = vld [vmem:[%s1090 + $0x18] sm:$0xff]
    %s1095 = scalar_lea.vmem %s3, 32
    %v1096 = vld [vmem:[%s1095] sm:$0xff]
    %v1097 = vld [vmem:[%s1095 + $0x8] sm:$0xff]
    %v1098 = vld [vmem:[%s1095 + $0x10] sm:$0xff]
    %v1099 = vld [vmem:[%s1095 + $0x18] sm:$0xff]
    %s1100 = scalar_lea.vmem [#allocation8], 1
    %v1101 = vld [vmem:[%s1100] sm:$0x1]
    %v1103 = vperm.slane %v1101, 0
    %v1106 = vsel %vm120, %v1086, 0
    %v1109 = vsel %vm120, %v1087, 0
    %1111 = vmatpush.msra.mxu0 0.0
    %1112 = vmatpush.msra.mxu0 0.0
    %1113 = vmatpush.msra.mxu0 0.0
    %1114 = vmatpush.msra.mxu0 0.0
    %1115 = vmatpush.msra.mxu0 0.0
    %1116 = vmatpush.msra.mxu0 0.0
    %1117 = vmatpush.msra.mxu0 0.0
    %1118 = vmatpush.msra.mxu0 0.0
    %1119 = vmatpush.msra.mxu0 0.0
    %1120 = vmatpush.msra.mxu0 0.0
    %1121 = vmatpush.msra.mxu0 0.0
    %1122 = vmatpush.msra.mxu0 0.0
    %1123 = vmatpush.msra.mxu0 %v1099
    %1124 = vmatpush.msra.mxu0 %v1098
    %1125 = vmatpush.msra.mxu0 %v1097
    %1126 = vmatpush.msra.mxu0 %v1096
    %1127 = vmatmul.f32.gmra.mxu0 %v1106
    %v1128 = vpop.f32.mrf.mxu0
    %v1129 = vadd.f32 %v1103, %v1128
    %1130 = vmatmul.f32.gmra.mxu0 %v1109
    %v1131 = vpop.f32.mrf.mxu0
    %v1132 = vadd.f32 %v1103, %v1131
    %1133 = vdwg.mxu0
    %1135 = vrot.lane.b32.xlu0 %v1129, 96
    %v1136 = vpop.permute.xlu0 %1135
    %v1137 = vsel %vm229, %v1129, 0
    %v1139 = vsel %vm229, %v1136, 0
    %1141 = vmatpush.xpose.msra.mxu0 0.0
    %1142 = vmatpush.xpose.msra.mxu0 0.0
    %1143 = vmatpush.xpose.msra.mxu0 0.0
    %1144 = vmatpush.xpose.msra.mxu0 0.0
    %1145 = vmatpush.xpose.msra.mxu0 0.0
    %1146 = vmatpush.xpose.msra.mxu0 0.0
    %1147 = vmatpush.xpose.msra.mxu0 0.0
    %1148 = vmatpush.xpose.msra.mxu0 0.0
    %1149 = vmatpush.xpose.msra.mxu0 0.0
    %1150 = vmatpush.xpose.msra.mxu0 0.0
    %1151 = vmatpush.xpose.msra.mxu0 0.0
    %1152 = vmatpush.xpose.msra.mxu0 0.0
    %1153 = vmatpush.xpose.msra.mxu0 0.0
    %1154 = vmatpush.xpose.msra.mxu0 0.0
    %1155 = vmatpush.xpose.msra.mxu0 0.0
    %1156 = vmatpush.xpose.msra.mxu0 %v1139
    %1157 = vmatmul.f32.gmra.mxu0 %v1137
    %v1158 = vpop.f32.mrf.mxu0
    %v1159 = vadd.f32 0.0, %v1158
    %1160 = vdwg.mxu0
    %1162 = vrot.lane.b32.xlu0 %v1132, 96
    %v1163 = vpop.permute.xlu0 %1162
    %v1164 = vsel %vm229, %v1132, 0
    %v1166 = vsel %vm229, %v1163, 0
    %1168 = vmatpush.xpose.msra.mxu0 0.0
    %1169 = vmatpush.xpose.msra.mxu0 0.0
    %1170 = vmatpush.xpose.msra.mxu0 0.0
    %1171 = vmatpush.xpose.msra.mxu0 0.0
    %1172 = vmatpush.xpose.msra.mxu0 0.0
    %1173 = vmatpush.xpose.msra.mxu0 0.0
    %1174 = vmatpush.xpose.msra.mxu0 0.0
    %1175 = vmatpush.xpose.msra.mxu0 0.0
    %1176 = vmatpush.xpose.msra.mxu0 0.0
    %1177 = vmatpush.xpose.msra.mxu0 0.0
    %1178 = vmatpush.xpose.msra.mxu0 0.0
    %1179 = vmatpush.xpose.msra.mxu0 0.0
    %1180 = vmatpush.xpose.msra.mxu0 0.0
    %1181 = vmatpush.xpose.msra.mxu0 0.0
    %1182 = vmatpush.xpose.msra.mxu0 0.0
    %1183 = vmatpush.xpose.msra.mxu0 %v1166
    %1184 = vmatmul.f32.gmra.mxu0 %v1164
    %v1185 = vpop.f32.mrf.mxu0
    %v1186 = vadd.f32 0.0, %v1185
    %1187 = vdwg.mxu0
    %v1188 = vmul.f32 %v1159, 0.35355338
    %v1189 = vmul.f32 %v1186, 0.35355338
    %v1190 = vadd.f32 %v1188, %v285
    %v1191 = vadd.f32 %v1189, %v286
    %v1192 = vsel %vm229, %v1190, -inf
    %1193 = vmax.xlane.f32.xlu0 %v1192
    %v1194 = vpop.xlane.xlu0 %1193
    %v1195 = vsel %vm229, %v1191, -inf
    %1196 = vmax.xlane.f32.xlu0 %v1195
    %v1197 = vpop.xlane.xlu0 %1196
    %v1198 = vsub.f32 %v1190, %v1194
    %v1199 = vsub.f32 %v1191, %v1197
    %v1200 = vmul.f32 %v1198, 1.442695
    %v1201 = vpow.pop %v1200
    %v1202 = vmul.f32 %v1199, 1.442695
    %v1203 = vpow.pop %v1202
    %v1204 = vsel %vm229, %v1201, 0.0
    %1205 = vadd.xlane.f32.xlu0 %v1204
    %v1206 = vpop.xlane.xlu0 %1205
    %v1207 = vsel %vm229, %v1203, 0.0
    %1208 = vadd.xlane.f32.xlu0 %v1207
    %v1209 = vpop.xlane.xlu0 %1208
    %v1210 = vrcp.pop %v1206
    %v1211 = vrcp.pop %v1209
    %v1212 = vmul.f32 %v1201, %v1210
    %v1213 = vmul.f32 %v1203, %v1211
    %1214 = vrot.lane.b32.xlu0 %v1129, 64
    %v1215 = vpop.permute.xlu0 %1214
    %v1218 = vsel %vm229, %v1212, 0
    %1220 = vmatpush.msra.mxu0 0.0
    %1221 = vmatpush.msra.mxu0 0.0
    %1222 = vmatpush.msra.mxu0 0.0
    %1223 = vmatpush.msra.mxu0 0.0
    %1224 = vmatpush.msra.mxu0 0.0
    %1225 = vmatpush.msra.mxu0 0.0
    %1226 = vmatpush.msra.mxu0 0.0
    %1227 = vmatpush.msra.mxu0 0.0
    %1228 = vmatpush.msra.mxu0 0.0
    %1229 = vmatpush.msra.mxu0 0.0
    %1230 = vmatpush.msra.mxu0 0.0
    %1231 = vmatpush.msra.mxu0 0.0
    %1232 = vmatpush.msra.mxu0 0.0
    %1233 = vmatpush.msra.mxu0 0.0
    %1234 = vmatpush.msra.mxu0 0.0
    %1235 = vmatpush.msra.mxu0 %v1215
    %1236 = vmatmul.f32.gmra.mxu0 %v1218
    %v1237 = vpop.f32.mrf.mxu0
    %v1238 = vadd.f32 0.0, %v1237
    %1239 = vdwg.mxu0
    %1240 = vrot.lane.b32.xlu0 %v1132, 64
    %v1241 = vpop.permute.xlu0 %1240
    %v1244 = vsel %vm229, %v1213, 0
    %1246 = vmatpush.msra.mxu0 0.0
    %1247 = vmatpush.msra.mxu0 0.0
    %1248 = vmatpush.msra.mxu0 0.0
    %1249 = vmatpush.msra.mxu0 0.0
    %1250 = vmatpush.msra.mxu0 0.0
    %1251 = vmatpush.msra.mxu0 0.0
    %1252 = vmatpush.msra.mxu0 0.0
    %1253 = vmatpush.msra.mxu0 0.0
    %1254 = vmatpush.msra.mxu0 0.0
    %1255 = vmatpush.msra.mxu0 0.0
    %1256 = vmatpush.msra.mxu0 0.0
    %1257 = vmatpush.msra.mxu0 0.0
    %1258 = vmatpush.msra.mxu0 0.0
    %1259 = vmatpush.msra.mxu0 0.0
    %1260 = vmatpush.msra.mxu0 0.0
    %1261 = vmatpush.msra.mxu0 %v1241
    %1262 = vmatmul.f32.gmra.mxu0 %v1244
    %v1263 = vpop.f32.mrf.mxu0
    %v1264 = vadd.f32 0.0, %v1263
    %1265 = vdwg.mxu0
    %1266 = vrot.lane.b32.xlu0 %v1129, 120
    %v1267 = vpop.permute.xlu0 %1266
    %1268 = vrot.lane.b32.xlu0 %v1129, 88
    %v1269 = vpop.permute.xlu0 %1268
    %v1270 = vsel %vm229, %v1267, 0
    %v1272 = vsel %vm229, %v1269, 0
    %1274 = vmatpush.xpose.msra.mxu0 0.0
    %1275 = vmatpush.xpose.msra.mxu0 0.0
    %1276 = vmatpush.xpose.msra.mxu0 0.0
    %1277 = vmatpush.xpose.msra.mxu0 0.0
    %1278 = vmatpush.xpose.msra.mxu0 0.0
    %1279 = vmatpush.xpose.msra.mxu0 0.0
    %1280 = vmatpush.xpose.msra.mxu0 0.0
    %1281 = vmatpush.xpose.msra.mxu0 0.0
    %1282 = vmatpush.xpose.msra.mxu0 0.0
    %1283 = vmatpush.xpose.msra.mxu0 0.0
    %1284 = vmatpush.xpose.msra.mxu0 0.0
    %1285 = vmatpush.xpose.msra.mxu0 0.0
    %1286 = vmatpush.xpose.msra.mxu0 0.0
    %1287 = vmatpush.xpose.msra.mxu0 0.0
    %1288 = vmatpush.xpose.msra.mxu0 0.0
    %1289 = vmatpush.xpose.msra.mxu0 %v1272
    %1290 = vmatmul.f32.gmra.mxu0 %v1270
    %v1291 = vpop.f32.mrf.mxu0
    %v1292 = vadd.f32 0.0, %v1291
    %1293 = vdwg.mxu0
    %1294 = vrot.lane.b32.xlu0 %v1132, 120
    %v1295 = vpop.permute.xlu0 %1294
    %1296 = vrot.lane.b32.xlu0 %v1132, 88
    %v1297 = vpop.permute.xlu0 %1296
    %v1298 = vsel %vm229, %v1295, 0
    %v1300 = vsel %vm229, %v1297, 0
    %1302 = vmatpush.xpose.msra.mxu0 0.0
    %1303 = vmatpush.xpose.msra.mxu0 0.0
    %1304 = vmatpush.xpose.msra.mxu0 0.0
    %1305 = vmatpush.xpose.msra.mxu0 0.0
    %1306 = vmatpush.xpose.msra.mxu0 0.0
    %1307 = vmatpush.xpose.msra.mxu0 0.0
    %1308 = vmatpush.xpose.msra.mxu0 0.0
    %1309 = vmatpush.xpose.msra.mxu0 0.0
    %1310 = vmatpush.xpose.msra.mxu0 0.0
    %1311 = vmatpush.xpose.msra.mxu0 0.0
    %1312 = vmatpush.xpose.msra.mxu0 0.0
    %1313 = vmatpush.xpose.msra.mxu0 0.0
    %1314 = vmatpush.xpose.msra.mxu0 0.0
    %1315 = vmatpush.xpose.msra.mxu0 0.0
    %1316 = vmatpush.xpose.msra.mxu0 0.0
    %1317 = vmatpush.xpose.msra.mxu0 %v1300
    %1318 = vmatmul.f32.gmra.mxu0 %v1298
    %v1319 = vpop.f32.mrf.mxu0
    %v1320 = vadd.f32 0.0, %v1319
    %1321 = vdwg.mxu0
    %v1322 = vmul.f32 %v1292, 0.35355338
    %v1323 = vmul.f32 %v1320, 0.35355338
    %v1324 = vadd.f32 %v1322, %v285
    %v1325 = vadd.f32 %v1323, %v286
    %v1326 = vsel %vm229, %v1324, -inf
    %1327 = vmax.xlane.f32.xlu0 %v1326
    %v1328 = vpop.xlane.xlu0 %1327
    %v1329 = vsel %vm229, %v1325, -inf
    %1330 = vmax.xlane.f32.xlu0 %v1329
    %v1331 = vpop.xlane.xlu0 %1330
    %v1332 = vsub.f32 %v1324, %v1328
    %v1333 = vsub.f32 %v1325, %v1331
    %v1334 = vmul.f32 %v1332, 1.442695
    %v1335 = vpow.pop %v1334
    %v1336 = vmul.f32 %v1333, 1.442695
    %v1337 = vpow.pop %v1336
    %v1338 = vsel %vm229, %v1335, 0.0
    %1339 = vadd.xlane.f32.xlu0 %v1338
    %v1340 = vpop.xlane.xlu0 %1339
    %v1341 = vsel %vm229, %v1337, 0.0
    %1342 = vadd.xlane.f32.xlu0 %v1341
    %v1343 = vpop.xlane.xlu0 %1342
    %v1344 = vrcp.pop %v1340
    %v1345 = vrcp.pop %v1343
    %v1346 = vmul.f32 %v1335, %v1344
    %v1347 = vmul.f32 %v1337, %v1345
    %1348 = vrot.lane.b32.xlu0 %v1129, 56
    %v1349 = vpop.permute.xlu0 %1348
    %v1352 = vsel %vm229, %v1346, 0
    %1354 = vmatpush.msra.mxu0 0.0
    %1355 = vmatpush.msra.mxu0 0.0
    %1356 = vmatpush.msra.mxu0 0.0
    %1357 = vmatpush.msra.mxu0 0.0
    %1358 = vmatpush.msra.mxu0 0.0
    %1359 = vmatpush.msra.mxu0 0.0
    %1360 = vmatpush.msra.mxu0 0.0
    %1361 = vmatpush.msra.mxu0 0.0
    %1362 = vmatpush.msra.mxu0 0.0
    %1363 = vmatpush.msra.mxu0 0.0
    %1364 = vmatpush.msra.mxu0 0.0
    %1365 = vmatpush.msra.mxu0 0.0
    %1366 = vmatpush.msra.mxu0 0.0
    %1367 = vmatpush.msra.mxu0 0.0
    %1368 = vmatpush.msra.mxu0 0.0
    %1369 = vmatpush.msra.mxu0 %v1349
    %1370 = vmatmul.f32.gmra.mxu0 %v1352
    %v1371 = vpop.f32.mrf.mxu0
    %v1372 = vadd.f32 0.0, %v1371
    %1373 = vdwg.mxu0
    %1374 = vrot.lane.b32.xlu0 %v1132, 56
    %v1375 = vpop.permute.xlu0 %1374
    %v1378 = vsel %vm229, %v1347, 0
    %1380 = vmatpush.msra.mxu0 0.0
    %1381 = vmatpush.msra.mxu0 0.0
    %1382 = vmatpush.msra.mxu0 0.0
    %1383 = vmatpush.msra.mxu0 0.0
    %1384 = vmatpush.msra.mxu0 0.0
    %1385 = vmatpush.msra.mxu0 0.0
    %1386 = vmatpush.msra.mxu0 0.0
    %1387 = vmatpush.msra.mxu0 0.0
    %1388 = vmatpush.msra.mxu0 0.0
    %1389 = vmatpush.msra.mxu0 0.0
    %1390 = vmatpush.msra.mxu0 0.0
    %1391 = vmatpush.msra.mxu0 0.0
    %1392 = vmatpush.msra.mxu0 0.0
    %1393 = vmatpush.msra.mxu0 0.0
    %1394 = vmatpush.msra.mxu0 0.0
    %1395 = vmatpush.msra.mxu0 %v1375
    %1396 = vmatmul.f32.gmra.mxu0 %v1378
    %v1397 = vpop.f32.mrf.mxu0
    %v1398 = vadd.f32 0.0, %v1397
    %1399 = vdwg.mxu0
    %v1401 = vsel %vm229, %v1372, 0
    %v1404 = vsel %vm229, %v1398, 0
    %1406 = vmatpush.msra.mxu0 0.0
    %1407 = vmatpush.msra.mxu0 0.0
    %1408 = vmatpush.msra.mxu0 0.0
    %1409 = vmatpush.msra.mxu0 0.0
    %1410 = vmatpush.msra.mxu0 0.0
    %1411 = vmatpush.msra.mxu0 0.0
    %1412 = vmatpush.msra.mxu0 0.0
    %1413 = vmatpush.msra.mxu0 0.0
    %1414 = vmatpush.msra.mxu0 0.0
    %1415 = vmatpush.msra.mxu0 0.0
    %1416 = vmatpush.msra.mxu0 0.0
    %1417 = vmatpush.msra.mxu0 0.0
    %1418 = vmatpush.msra.mxu0 0.0
    %1419 = vmatpush.msra.mxu0 0.0
    %1420 = vmatpush.msra.mxu0 0.0
    %1421 = vmatpush.msra.mxu0 %v1092
    %1422 = vmatmul.f32.gmra.mxu0 %v1401
    %v1423 = vpop.f32.mrf.mxu0
    %v1424 = vadd.f32 0.0, %v1423
    %1425 = vmatmul.f32.gmra.mxu0 %v1404
    %v1426 = vpop.f32.mrf.mxu0
    %v1427 = vadd.f32 0.0, %v1426
    %1428 = vdwg.mxu0
    %v1430 = vsel %vm229, %v1238, 0
    %v1433 = vsel %vm229, %v1264, 0
    %1435 = vmatpush.msra.mxu0 0.0
    %1436 = vmatpush.msra.mxu0 0.0
    %1437 = vmatpush.msra.mxu0 0.0
    %1438 = vmatpush.msra.mxu0 0.0
    %1439 = vmatpush.msra.mxu0 0.0
    %1440 = vmatpush.msra.mxu0 0.0
    %1441 = vmatpush.msra.mxu0 0.0
    %1442 = vmatpush.msra.mxu0 0.0
    %1443 = vmatpush.msra.mxu0 0.0
    %1444 = vmatpush.msra.mxu0 0.0
    %1445 = vmatpush.msra.mxu0 0.0
    %1446 = vmatpush.msra.mxu0 0.0
    %1447 = vmatpush.msra.mxu0 0.0
    %1448 = vmatpush.msra.mxu0 0.0
    %1449 = vmatpush.msra.mxu0 0.0
    %1450 = vmatpush.msra.mxu0 %v1091
    %1451 = vmatmul.f32.gmra.mxu0 %v1430
    %v1452 = vpop.f32.mrf.mxu0
    %v1453 = vadd.f32 %v1424, %v1452
    %1454 = vmatmul.f32.gmra.mxu0 %v1433
    %v1455 = vpop.f32.mrf.mxu0
    %v1456 = vadd.f32 %v1427, %v1455
    %1457 = vdwg.mxu0
    %1458 = vrot.lane.b32.xlu0 %v1129, 112
    %v1459 = vpop.permute.xlu0 %1458
    %1460 = vrot.lane.b32.xlu0 %v1129, 80
    %v1461 = vpop.permute.xlu0 %1460
    %v1462 = vsel %vm229, %v1459, 0
    %v1464 = vsel %vm229, %v1461, 0
    %1466 = vmatpush.xpose.msra.mxu0 0.0
    %1467 = vmatpush.xpose.msra.mxu0 0.0
    %1468 = vmatpush.xpose.msra.mxu0 0.0
    %1469 = vmatpush.xpose.msra.mxu0 0.0
    %1470 = vmatpush.xpose.msra.mxu0 0.0
    %1471 = vmatpush.xpose.msra.mxu0 0.0
    %1472 = vmatpush.xpose.msra.mxu0 0.0
    %1473 = vmatpush.xpose.msra.mxu0 0.0
    %1474 = vmatpush.xpose.msra.mxu0 0.0
    %1475 = vmatpush.xpose.msra.mxu0 0.0
    %1476 = vmatpush.xpose.msra.mxu0 0.0
    %1477 = vmatpush.xpose.msra.mxu0 0.0
    %1478 = vmatpush.xpose.msra.mxu0 0.0
    %1479 = vmatpush.xpose.msra.mxu0 0.0
    %1480 = vmatpush.xpose.msra.mxu0 0.0
    %1481 = vmatpush.xpose.msra.mxu0 %v1464
    %1482 = vmatmul.f32.gmra.mxu0 %v1462
    %v1483 = vpop.f32.mrf.mxu0
    %v1484 = vadd.f32 0.0, %v1483
    %1485 = vdwg.mxu0
    %1486 = vrot.lane.b32.xlu0 %v1132, 112
    %v1487 = vpop.permute.xlu0 %1486
    %1488 = vrot.lane.b32.xlu0 %v1132, 80
    %v1489 = vpop.permute.xlu0 %1488
    %v1490 = vsel %vm229, %v1487, 0
    %v1492 = vsel %vm229, %v1489, 0
    %1494 = vmatpush.xpose.msra.mxu0 0.0
    %1495 = vmatpush.xpose.msra.mxu0 0.0
    %1496 = vmatpush.xpose.msra.mxu0 0.0
    %1497 = vmatpush.xpose.msra.mxu0 0.0
    %1498 = vmatpush.xpose.msra.mxu0 0.0
    %1499 = vmatpush.xpose.msra.mxu0 0.0
    %1500 = vmatpush.xpose.msra.mxu0 0.0
    %1501 = vmatpush.xpose.msra.mxu0 0.0
    %1502 = vmatpush.xpose.msra.mxu0 0.0
    %1503 = vmatpush.xpose.msra.mxu0 0.0
    %1504 = vmatpush.xpose.msra.mxu0 0.0
    %1505 = vmatpush.xpose.msra.mxu0 0.0
    %1506 = vmatpush.xpose.msra.mxu0 0.0
    %1507 = vmatpush.xpose.msra.mxu0 0.0
    %1508 = vmatpush.xpose.msra.mxu0 0.0
    %1509 = vmatpush.xpose.msra.mxu0 %v1492
    %1510 = vmatmul.f32.gmra.mxu0 %v1490
    %v1511 = vpop.f32.mrf.mxu0
    %v1512 = vadd.f32 0.0, %v1511
    %1513 = vdwg.mxu0
    %v1514 = vmul.f32 %v1484, 0.35355338
    %v1515 = vmul.f32 %v1512, 0.35355338
    %v1516 = vadd.f32 %v1514, %v285
    %v1517 = vadd.f32 %v1515, %v286
    %v1518 = vsel %vm229, %v1516, -inf
    %1519 = vmax.xlane.f32.xlu0 %v1518
    %v1520 = vpop.xlane.xlu0 %1519
    %v1521 = vsel %vm229, %v1517, -inf
    %1522 = vmax.xlane.f32.xlu0 %v1521
    %v1523 = vpop.xlane.xlu0 %1522
    %v1524 = vsub.f32 %v1516, %v1520
    %v1525 = vsub.f32 %v1517, %v1523
    %v1526 = vmul.f32 %v1524, 1.442695
    %v1527 = vpow.pop %v1526
    %v1528 = vmul.f32 %v1525, 1.442695
    %v1529 = vpow.pop %v1528
    %v1530 = vsel %vm229, %v1527, 0.0
    %1531 = vadd.xlane.f32.xlu0 %v1530
    %v1532 = vpop.xlane.xlu0 %1531
    %v1533 = vsel %vm229, %v1529, 0.0
    %1534 = vadd.xlane.f32.xlu0 %v1533
    %v1535 = vpop.xlane.xlu0 %1534
    %v1536 = vrcp.pop %v1532
    %v1537 = vrcp.pop %v1535
    %v1538 = vmul.f32 %v1527, %v1536
    %v1539 = vmul.f32 %v1529, %v1537
    %1540 = vrot.lane.b32.xlu0 %v1129, 48
    %v1541 = vpop.permute.xlu0 %1540
    %v1544 = vsel %vm229, %v1538, 0
    %1546 = vmatpush.msra.mxu0 0.0
    %1547 = vmatpush.msra.mxu0 0.0
    %1548 = vmatpush.msra.mxu0 0.0
    %1549 = vmatpush.msra.mxu0 0.0
    %1550 = vmatpush.msra.mxu0 0.0
    %1551 = vmatpush.msra.mxu0 0.0
    %1552 = vmatpush.msra.mxu0 0.0
    %1553 = vmatpush.msra.mxu0 0.0
    %1554 = vmatpush.msra.mxu0 0.0
    %1555 = vmatpush.msra.mxu0 0.0
    %1556 = vmatpush.msra.mxu0 0.0
    %1557 = vmatpush.msra.mxu0 0.0
    %1558 = vmatpush.msra.mxu0 0.0
    %1559 = vmatpush.msra.mxu0 0.0
    %1560 = vmatpush.msra.mxu0 0.0
    %1561 = vmatpush.msra.mxu0 %v1541
    %1562 = vmatmul.f32.gmra.mxu0 %v1544
    %v1563 = vpop.f32.mrf.mxu0
    %v1564 = vadd.f32 0.0, %v1563
    %1565 = vdwg.mxu0
    %1566 = vrot.lane.b32.xlu0 %v1132, 48
    %v1567 = vpop.permute.xlu0 %1566
    %v1570 = vsel %vm229, %v1539, 0
    %1572 = vmatpush.msra.mxu0 0.0
    %1573 = vmatpush.msra.mxu0 0.0
    %1574 = vmatpush.msra.mxu0 0.0
    %1575 = vmatpush.msra.mxu0 0.0
    %1576 = vmatpush.msra.mxu0 0.0
    %1577 = vmatpush.msra.mxu0 0.0
    %1578 = vmatpush.msra.mxu0 0.0
    %1579 = vmatpush.msra.mxu0 0.0
    %1580 = vmatpush.msra.mxu0 0.0
    %1581 = vmatpush.msra.mxu0 0.0
    %1582 = vmatpush.msra.mxu0 0.0
    %1583 = vmatpush.msra.mxu0 0.0
    %1584 = vmatpush.msra.mxu0 0.0
    %1585 = vmatpush.msra.mxu0 0.0
    %1586 = vmatpush.msra.mxu0 0.0
    %1587 = vmatpush.msra.mxu0 %v1567
    %1588 = vmatmul.f32.gmra.mxu0 %v1570
    %v1589 = vpop.f32.mrf.mxu0
    %v1590 = vadd.f32 0.0, %v1589
    %1591 = vdwg.mxu0
    %v1593 = vsel %vm229, %v1564, 0
    %v1596 = vsel %vm229, %v1590, 0
    %1598 = vmatpush.msra.mxu0 0.0
    %1599 = vmatpush.msra.mxu0 0.0
    %1600 = vmatpush.msra.mxu0 0.0
    %1601 = vmatpush.msra.mxu0 0.0
    %1602 = vmatpush.msra.mxu0 0.0
    %1603 = vmatpush.msra.mxu0 0.0
    %1604 = vmatpush.msra.mxu0 0.0
    %1605 = vmatpush.msra.mxu0 0.0
    %1606 = vmatpush.msra.mxu0 0.0
    %1607 = vmatpush.msra.mxu0 0.0
    %1608 = vmatpush.msra.mxu0 0.0
    %1609 = vmatpush.msra.mxu0 0.0
    %1610 = vmatpush.msra.mxu0 0.0
    %1611 = vmatpush.msra.mxu0 0.0
    %1612 = vmatpush.msra.mxu0 0.0
    %1613 = vmatpush.msra.mxu0 %v1093
    %1614 = vmatmul.f32.gmra.mxu0 %v1593
    %v1615 = vpop.f32.mrf.mxu0
    %v1616 = vadd.f32 0.0, %v1615
    %1617 = vmatmul.f32.gmra.mxu0 %v1596
    %v1618 = vpop.f32.mrf.mxu0
    %v1619 = vadd.f32 0.0, %v1618
    %1620 = vdwg.mxu0
    %v1621 = vadd.f32 %v1453, %v1616
    %v1622 = vadd.f32 %v1456, %v1619
    %1623 = vrot.lane.b32.xlu0 %v1129, 104
    %v1624 = vpop.permute.xlu0 %1623
    %1625 = vrot.lane.b32.xlu0 %v1129, 72
    %v1626 = vpop.permute.xlu0 %1625
    %v1627 = vsel %vm229, %v1624, 0
    %v1629 = vsel %vm229, %v1626, 0
    %1631 = vmatpush.xpose.msra.mxu0 0.0
    %1632 = vmatpush.xpose.msra.mxu0 0.0
    %1633 = vmatpush.xpose.msra.mxu0 0.0
    %1634 = vmatpush.xpose.msra.mxu0 0.0
    %1635 = vmatpush.xpose.msra.mxu0 0.0
    %1636 = vmatpush.xpose.msra.mxu0 0.0
    %1637 = vmatpush.xpose.msra.mxu0 0.0
    %1638 = vmatpush.xpose.msra.mxu0 0.0
    %1639 = vmatpush.xpose.msra.mxu0 0.0
    %1640 = vmatpush.xpose.msra.mxu0 0.0
    %1641 = vmatpush.xpose.msra.mxu0 0.0
    %1642 = vmatpush.xpose.msra.mxu0 0.0
    %1643 = vmatpush.xpose.msra.mxu0 0.0
    %1644 = vmatpush.xpose.msra.mxu0 0.0
    %1645 = vmatpush.xpose.msra.mxu0 0.0
    %1646 = vmatpush.xpose.msra.mxu0 %v1629
    %1647 = vmatmul.f32.gmra.mxu0 %v1627
    %v1648 = vpop.f32.mrf.mxu0
    %v1649 = vadd.f32 0.0, %v1648
    %1650 = vdwg.mxu0
    %1651 = vrot.lane.b32.xlu0 %v1132, 104
    %v1652 = vpop.permute.xlu0 %1651
    %1653 = vrot.lane.b32.xlu0 %v1132, 72
    %v1654 = vpop.permute.xlu0 %1653
    %v1655 = vsel %vm229, %v1652, 0
    %v1657 = vsel %vm229, %v1654, 0
    %1659 = vmatpush.xpose.msra.mxu0 0.0
    %1660 = vmatpush.xpose.msra.mxu0 0.0
    %1661 = vmatpush.xpose.msra.mxu0 0.0
    %1662 = vmatpush.xpose.msra.mxu0 0.0
    %1663 = vmatpush.xpose.msra.mxu0 0.0
    %1664 = vmatpush.xpose.msra.mxu0 0.0
    %1665 = vmatpush.xpose.msra.mxu0 0.0
    %1666 = vmatpush.xpose.msra.mxu0 0.0
    %1667 = vmatpush.xpose.msra.mxu0 0.0
    %1668 = vmatpush.xpose.msra.mxu0 0.0
    %1669 = vmatpush.xpose.msra.mxu0 0.0
    %1670 = vmatpush.xpose.msra.mxu0 0.0
    %1671 = vmatpush.xpose.msra.mxu0 0.0
    %1672 = vmatpush.xpose.msra.mxu0 0.0
    %1673 = vmatpush.xpose.msra.mxu0 0.0
    %1674 = vmatpush.xpose.msra.mxu0 %v1657
    %1675 = vmatmul.f32.gmra.mxu0 %v1655
    %v1676 = vpop.f32.mrf.mxu0
    %v1677 = vadd.f32 0.0, %v1676
    %1678 = vdwg.mxu0
    %v1679 = vmul.f32 %v1649, 0.35355338
    %v1680 = vmul.f32 %v1677, 0.35355338
    %v1681 = vadd.f32 %v1679, %v285
    %v1682 = vadd.f32 %v1680, %v286
    %v1683 = vsel %vm229, %v1681, -inf
    %1684 = vmax.xlane.f32.xlu0 %v1683
    %v1685 = vpop.xlane.xlu0 %1684
    %v1686 = vsel %vm229, %v1682, -inf
    %1687 = vmax.xlane.f32.xlu0 %v1686
    %v1688 = vpop.xlane.xlu0 %1687
    %v1689 = vsub.f32 %v1681, %v1685
    %v1690 = vsub.f32 %v1682, %v1688
    %v1691 = vmul.f32 %v1689, 1.442695
    %v1692 = vpow.pop %v1691
    %v1693 = vmul.f32 %v1690, 1.442695
    %v1694 = vpow.pop %v1693
    %v1695 = vsel %vm229, %v1692, 0.0
    %1696 = vadd.xlane.f32.xlu0 %v1695
    %v1697 = vpop.xlane.xlu0 %1696
    %v1698 = vsel %vm229, %v1694, 0.0
    %1699 = vadd.xlane.f32.xlu0 %v1698
    %v1700 = vpop.xlane.xlu0 %1699
    %v1701 = vrcp.pop %v1697
    %v1702 = vrcp.pop %v1700
    %v1703 = vmul.f32 %v1692, %v1701
    %v1704 = vmul.f32 %v1694, %v1702
    %1705 = vrot.lane.b32.xlu0 %v1129, 40
    %v1706 = vpop.permute.xlu0 %1705
    %v1709 = vsel %vm229, %v1703, 0
    %1711 = vmatpush.msra.mxu0 0.0
    %1712 = vmatpush.msra.mxu0 0.0
    %1713 = vmatpush.msra.mxu0 0.0
    %1714 = vmatpush.msra.mxu0 0.0
    %1715 = vmatpush.msra.mxu0 0.0
    %1716 = vmatpush.msra.mxu0 0.0
    %1717 = vmatpush.msra.mxu0 0.0
    %1718 = vmatpush.msra.mxu0 0.0
    %1719 = vmatpush.msra.mxu0 0.0
    %1720 = vmatpush.msra.mxu0 0.0
    %1721 = vmatpush.msra.mxu0 0.0
    %1722 = vmatpush.msra.mxu0 0.0
    %1723 = vmatpush.msra.mxu0 0.0
    %1724 = vmatpush.msra.mxu0 0.0
    %1725 = vmatpush.msra.mxu0 0.0
    %1726 = vmatpush.msra.mxu0 %v1706
    %1727 = vmatmul.f32.gmra.mxu0 %v1709
    %v1728 = vpop.f32.mrf.mxu0
    %v1729 = vadd.f32 0.0, %v1728
    %1730 = vdwg.mxu0
    %1731 = vrot.lane.b32.xlu0 %v1132, 40
    %v1732 = vpop.permute.xlu0 %1731
    %v1735 = vsel %vm229, %v1704, 0
    %1737 = vmatpush.msra.mxu0 0.0
    %1738 = vmatpush.msra.mxu0 0.0
    %1739 = vmatpush.msra.mxu0 0.0
    %1740 = vmatpush.msra.mxu0 0.0
    %1741 = vmatpush.msra.mxu0 0.0
    %1742 = vmatpush.msra.mxu0 0.0
    %1743 = vmatpush.msra.mxu0 0.0
    %1744 = vmatpush.msra.mxu0 0.0
    %1745 = vmatpush.msra.mxu0 0.0
    %1746 = vmatpush.msra.mxu0 0.0
    %1747 = vmatpush.msra.mxu0 0.0
    %1748 = vmatpush.msra.mxu0 0.0
    %1749 = vmatpush.msra.mxu0 0.0
    %1750 = vmatpush.msra.mxu0 0.0
    %1751 = vmatpush.msra.mxu0 0.0
    %1752 = vmatpush.msra.mxu0 %v1732
    %1753 = vmatmul.f32.gmra.mxu0 %v1735
    %v1754 = vpop.f32.mrf.mxu0
    %v1755 = vadd.f32 0.0, %v1754
    %1756 = vdwg.mxu0
    %v1758 = vsel %vm229, %v1729, 0
    %v1761 = vsel %vm229, %v1755, 0
    %1763 = vmatpush.msra.mxu0 0.0
    %1764 = vmatpush.msra.mxu0 0.0
    %1765 = vmatpush.msra.mxu0 0.0
    %1766 = vmatpush.msra.mxu0 0.0
    %1767 = vmatpush.msra.mxu0 0.0
    %1768 = vmatpush.msra.mxu0 0.0
    %1769 = vmatpush.msra.mxu0 0.0
    %1770 = vmatpush.msra.mxu0 0.0
    %1771 = vmatpush.msra.mxu0 0.0
    %1772 = vmatpush.msra.mxu0 0.0
    %1773 = vmatpush.msra.mxu0 0.0
    %1774 = vmatpush.msra.mxu0 0.0
    %1775 = vmatpush.msra.mxu0 0.0
    %1776 = vmatpush.msra.mxu0 0.0
    %1777 = vmatpush.msra.mxu0 0.0
    %1778 = vmatpush.msra.mxu0 %v1094
    %1779 = vmatmul.f32.gmra.mxu0 %v1758
    %v1780 = vpop.f32.mrf.mxu0
    %v1781 = vadd.f32 0.0, %v1780
    %1782 = vmatmul.f32.gmra.mxu0 %v1761
    %v1783 = vpop.f32.mrf.mxu0
    %v1784 = vadd.f32 0.0, %v1783
    %1785 = vdwg.mxu0
    %v1786 = vadd.f32 %v1621, %v1781
    %v1787 = vadd.f32 %v1622, %v1784
    %v1788 = vperm.slane %v1089, 0
    %v1789 = vadd.f32 %v1786, %v1788
    %v1790 = vadd.f32 %v1787, %v1788
    %v1791 = vadd.f32 %v1789, %v1086
    %v1792 = vadd.f32 %v1790, %v1087
    %v1793 = vsel %vm120, %v1791, 0.0
    %1794 = vadd.xlane.f32.xlu0 %v1793
    %v1795 = vpop.xlane.xlu0 %1794
    %v1796 = vsel %vm120, %v1792, 0.0
    %1797 = vadd.xlane.f32.xlu0 %v1796
    %v1798 = vpop.xlane.xlu0 %1797
    %v1799 = vmul.f32 %v1795, %v133
    %v1800 = vmul.f32 %v1798, %v133
    %v1801 = vsub.f32 %v1791, %v1799
    %v1802 = vsub.f32 %v1792, %v1800
    %v1803 = vmul.f32 %v1801, %v1801
    %v1804 = vmul.f32 %v1802, %v1802
    %v1805 = vsel %vm120, %v1803, 0.0
    %1806 = vadd.xlane.f32.xlu0 %v1805
    %v1807 = vpop.xlane.xlu0 %1806
    %v1808 = vsel %vm120, %v1804, 0.0
    %1809 = vadd.xlane.f32.xlu0 %v1808
    %v1810 = vpop.xlane.xlu0 %1809
    %v1811 = vmul.f32 %v1807, %v133
    %v1812 = vmul.f32 %v1810, %v133
    %v1813 = vadd.f32 %v1811, 1e-12
    %v1814 = vadd.f32 %v1812, 1e-12
    %v1815 = vrsqrt.pop %v1813
    %v1816 = vmul.f32 %v1815, %v1813
    %v1817 = vmul.f32 %v1816, %v1815
    %v1818 = vmul.f32 0.5, %v1817
    %v1819 = vsub.f32 1.5, %v1818
    %v1820 = vmul.f32 %v1815, %v1819
    %vm1821 = vweird.f32 %v1813
    %vm1822 = vweird.f32 %v1815
    %vm1823 = vmor %vm1821, %vm1822
    %v1824 = vsel %vm1823, %v1815, %v1820
    %v1825 = vrsqrt.pop %v1814
    %v1826 = vmul.f32 %v1825, %v1814
    %v1827 = vmul.f32 %v1826, %v1825
    %v1828 = vmul.f32 0.5, %v1827
    %v1829 = vsub.f32 1.5, %v1828
    %v1830 = vmul.f32 %v1825, %v1829
    %vm1831 = vweird.f32 %v1814
    %vm1832 = vweird.f32 %v1825
    %vm1833 = vmor %vm1831, %vm1832
    %v1834 = vsel %vm1833, %v1825, %v1830
    %v1835 = vmul.f32 %v1801, %v1824
    %v1836 = vmul.f32 %v1802, %v1834
    %v1837 = vperm.slane %v1089, 1
    %v1838 = vmul.f32 %v1835, %v1837
    %v1839 = vmul.f32 %v1836, %v1837
    %v1840 = vperm.slane %v1089, 2
    %v1841 = vadd.f32 %v1838, %v1840
    %v1842 = vadd.f32 %v1839, %v1840
    %s1843 = scalar_lea.vmem %s7, 32
    %v1844 = vld [vmem:[%s1843] sm:$0xff]
    %v1845 = vld [vmem:[%s1843 + $0x8] sm:$0xff]
    %v1846 = vld [vmem:[%s1843 + $0x10] sm:$0xff]
    %v1847 = vld [vmem:[%s1843 + $0x18] sm:$0xff]
    %s1848 = scalar_lea.vmem [#allocation10], 1
    %v1849 = vld [vmem:[%s1848] sm:$0x1]
    %v1851 = vperm.slane %v1849, 0
    %v1854 = vsel %vm120, %v1841, 0
    %v1857 = vsel %vm120, %v1842, 0
    %1859 = vmatpush.msra.mxu0 0.0
    %1860 = vmatpush.msra.mxu0 0.0
    %1861 = vmatpush.msra.mxu0 0.0
    %1862 = vmatpush.msra.mxu0 0.0
    %1863 = vmatpush.msra.mxu0 0.0
    %1864 = vmatpush.msra.mxu0 0.0
    %1865 = vmatpush.msra.mxu0 0.0
    %1866 = vmatpush.msra.mxu0 0.0
    %1867 = vmatpush.msra.mxu0 0.0
    %1868 = vmatpush.msra.mxu0 0.0
    %1869 = vmatpush.msra.mxu0 0.0
    %1870 = vmatpush.msra.mxu0 0.0
    %1871 = vmatpush.msra.mxu0 %v1847
    %1872 = vmatpush.msra.mxu0 %v1846
    %1873 = vmatpush.msra.mxu0 %v1845
    %1874 = vmatpush.msra.mxu0 %v1844
    %1875 = vmatmul.f32.gmra.mxu0 %v1854
    %v1876 = vpop.f32.mrf.mxu0
    %v1877 = vadd.f32 %v1851, %v1876
    %1878 = vmatmul.f32.gmra.mxu0 %v1857
    %v1879 = vpop.f32.mrf.mxu0
    %v1880 = vadd.f32 %v1851, %v1879
    %1881 = vdwg.mxu0
    %v1882 = vmul.f32 %v1877, 0.5
    %v1883 = vmul.f32 %v1880, 0.5
    %v1884 = vmul.f32 %v1877, 0.044715
    %v1885 = vmul.f32 %v1880, 0.044715
    %v1886 = vmul.f32 %v1884, %v1877
    %v1887 = vmul.f32 %v1885, %v1880
    %v1888 = vmul.f32 %v1886, %v1877
    %v1889 = vmul.f32 %v1887, %v1880
    %v1890 = vadd.f32 %v1877, %v1888
    %v1891 = vadd.f32 %v1880, %v1889
    %v1892 = vmul.f32 %v1890, 0.7978846
    %v1893 = vmul.f32 %v1891, 0.7978846
    %v1894 = vtanh.pop %v1892
    %v1895 = vtanh.pop %v1893
    %v1896 = vadd.f32 %v1894, 1.0
    %v1897 = vadd.f32 %v1895, 1.0
    %v1898 = vmul.f32 %v1882, %v1896
    %v1899 = vmul.f32 %v1883, %v1897
    %s1900 = scalar_lea.vmem %s9, 64
    %v1901 = vld [vmem:[%s1900] sm:$0xff]
    %v1902 = vld [vmem:[%s1900 + $0x8] sm:$0xff]
    %v1903 = vld [vmem:[%s1900 + $0x10] sm:$0xff]
    %v1904 = vld [vmem:[%s1900 + $0x18] sm:$0xff]
    %v1905 = vld [vmem:[%s1900 + $0x20] sm:$0xff]
    %v1906 = vld [vmem:[%s1900 + $0x28] sm:$0xff]
    %v1907 = vld [vmem:[%s1900 + $0x30] sm:$0xff]
    %v1908 = vld [vmem:[%s1900 + $0x38] sm:$0xff]
    %v1909 = vperm.slane %v1089, 3
    %v1911 = vsel %vm1006, %v1898, 0
    %v1914 = vsel %vm1006, %v1899, 0
    %1916 = vmatpush.msra.mxu0 0.0
    %1917 = vmatpush.msra.mxu0 0.0
    %1918 = vmatpush.msra.mxu0 0.0
    %1919 = vmatpush.msra.mxu0 0.0
    %1920 = vmatpush.msra.mxu0 0.0
    %1921 = vmatpush.msra.mxu0 0.0
    %1922 = vmatpush.msra.mxu0 0.0
    %1923 = vmatpush.msra.mxu0 0.0
    %1924 = vmatpush.msra.mxu0 %v1908
    %1925 = vmatpush.msra.mxu0 %v1907
    %1926 = vmatpush.msra.mxu0 %v1906
    %1927 = vmatpush.msra.mxu0 %v1905
    %1928 = vmatpush.msra.mxu0 %v1904
    %1929 = vmatpush.msra.mxu0 %v1903
    %1930 = vmatpush.msra.mxu0 %v1902
    %1931 = vmatpush.msra.mxu0 %v1901
    %1932 = vmatmul.f32.gmra.mxu0 %v1911
    %v1933 = vpop.f32.mrf.mxu0
    %v1934 = vadd.f32 %v1909, %v1933
    %1935 = vmatmul.f32.gmra.mxu0 %v1914
    %v1936 = vpop.f32.mrf.mxu0
    %v1937 = vadd.f32 %v1909, %v1936
    %1938 = vdwg.mxu0
    %v1939 = vadd.f32 %v1934, %v1841
    %v1940 = vadd.f32 %v1937, %v1842
    %v1941 = vsel %vm120, %v1939, 0.0
    %1942 = vadd.xlane.f32.xlu0 %v1941
    %v1943 = vpop.xlane.xlu0 %1942
    %v1944 = vsel %vm120, %v1940, 0.0
    %1945 = vadd.xlane.f32.xlu0 %v1944
    %v1946 = vpop.xlane.xlu0 %1945
    %v1947 = vmul.f32 %v1943, %v133
    %v1948 = vmul.f32 %v1946, %v133
    %v1949 = vsub.f32 %v1939, %v1947
    %v1950 = vsub.f32 %v1940, %v1948
    %v1951 = vmul.f32 %v1949, %v1949
    %v1952 = vmul.f32 %v1950, %v1950
    %v1953 = vsel %vm120, %v1951, 0.0
    %1954 = vadd.xlane.f32.xlu0 %v1953
    %v1955 = vpop.xlane.xlu0 %1954
    %v1956 = vsel %vm120, %v1952, 0.0
    %1957 = vadd.xlane.f32.xlu0 %v1956
    %v1958 = vpop.xlane.xlu0 %1957
    %v1959 = vmul.f32 %v1955, %v133
    %v1960 = vmul.f32 %v1958, %v133
    %v1961 = vadd.f32 %v1959, 1e-12
    %v1962 = vadd.f32 %v1960, 1e-12
    %v1963 = vrsqrt.pop %v1961
    %v1964 = vmul.f32 %v1963, %v1961
    %v1965 = vmul.f32 %v1964, %v1963
    %v1966 = vmul.f32 0.5, %v1965
    %v1967 = vsub.f32 1.5, %v1966
    %v1968 = vmul.f32 %v1963, %v1967
    %vm1969 = vweird.f32 %v1961
    %vm1970 = vweird.f32 %v1963
    %vm1971 = vmor %vm1969, %vm1970
    %v1972 = vsel %vm1971, %v1963, %v1968
    %v1973 = vrsqrt.pop %v1962
    %v1974 = vmul.f32 %v1973, %v1962
    %v1975 = vmul.f32 %v1974, %v1973
    %v1976 = vmul.f32 0.5, %v1975
    %v1977 = vsub.f32 1.5, %v1976
    %v1978 = vmul.f32 %v1973, %v1977
    %vm1979 = vweird.f32 %v1962
    %vm1980 = vweird.f32 %v1973
    %vm1981 = vmor %vm1979, %vm1980
    %v1982 = vsel %vm1981, %v1973, %v1978
    %v1983 = vmul.f32 %v1949, %v1972
    %v1984 = vmul.f32 %v1950, %v1982
    %v1985 = vperm.slane %v1089, 4
    %v1986 = vmul.f32 %v1983, %v1985
    %v1987 = vmul.f32 %v1984, %v1985
    %v1988 = vperm.slane %v1089, 5
    %v1989 = vadd.f32 %v1986, %v1988
    %v1990 = vadd.f32 %v1987, %v1988
    %1991 = vst.msk [vmem:[#allocation11] sm:$0xff] %vm120, %v1989
    %1992 = vst.msk [vmem:[#allocation11 + $0x8] sm:$0xff] %vm120, %v1990
    %v1993 = vld [vmem:[%s10] sm:$0xff]
    %v1994 = vld [vmem:[%s10 + $0x8] sm:$0xff]
    %v1995 = vld [vmem:[%s10 + $0x10] sm:$0xff]
    %v1996 = vld [vmem:[%s10 + $0x18] sm:$0xff]
    %v1997 = vperm.slane %v117, 2
    %v2000 = vrot.slane %v1990, 7
    %vm2001 = vcmask 1041409
    %v2002 = vsel %vm2001, %v2000, %v1989
    %v2003 = vsel %vm120, %v2002, 0
    %2005 = vmatpush.msra.mxu0 0.0
    %2006 = vmatpush.msra.mxu0 0.0
    %2007 = vmatpush.msra.mxu0 0.0
    %2008 = vmatpush.msra.mxu0 0.0
    %2009 = vmatpush.msra.mxu0 0.0
    %2010 = vmatpush.msra.mxu0 0.0
    %2011 = vmatpush.msra.mxu0 0.0
    %2012 = vmatpush.msra.mxu0 0.0
    %2013 = vmatpush.msra.mxu0 0.0
    %2014 = vmatpush.msra.mxu0 0.0
    %2015 = vmatpush.msra.mxu0 0.0
    %2016 = vmatpush.msra.mxu0 0.0
    %2017 = vmatpush.msra.mxu0 %v1996
    %2018 = vmatpush.msra.mxu0 %v1995
    %2019 = vmatpush.msra.mxu0 %v1994
    %2020 = vmatpush.msra.mxu0 %v1993
    %2021 = vmatmul.f32.gmra.mxu0 %v2003
    %v2022 = vpop.f32.mrf.mxu0
    %v2023 = vadd.f32 %v1997, %v2022
    %2024 = vdwg.mxu0
    %v2025 = vtanh.pop %v2023
    %v2026 = vperm.slane %v117, 3
    %v2027 = vmul.f32 %v2025, %v2026
    %vm2028 = vcmask 254976
    %v2029 = vsel %vm2028, %v2027, 0.0
    %2030 = vadd.xlane.f32.xlu0 %v2029
    %v2031 = vpop.xlane.xlu0 %2030
    %v2032 = vperm.slane %v117, 4
    %v2033 = vadd.f32 %v2031, %v2032
    %vm2034 = vcmask 1024
    %2035 = vst.msk [vmem:[%s12] sm:$0x3] %vm2034, %v2033
    // Predicated region
    $region66: #{tpu_custom_call.1} parent=1 // pred_check
      _
    $region67: #{tpu_custom_call.1} parent=1 // pred_check_branch
      %2037 = sbr.rel (0) target = $region69
    $region68: #{tpu_custom_call.1} parent=1 // pred_region
      %2039 = vsyncadd [#allocation4], 0
      %s2040 = sshll.u32 [#allocation11], 4
      %s2041 = int_to_ptr.vmem [resolvable:$true] %s2040
      %s2042 = sshll.u32 %s11, 4
      %s2043 = int_to_ptr.hbm [resolvable:$true] %s2042
      %2048 = dma.vmem_to_hbm [thread:$0]  %s2041, 256, %s2043, [#allocation4], 128, 128, 8
    $region69: #{tpu_custom_call.1} parent=1 // pred_fallthru
      _
    // Predicated region
    $region70: #{tpu_custom_call.1} parent=1 // pred_check
      _
    $region71: #{tpu_custom_call.1} parent=1 // pred_check_branch
      %2050 = sbr.rel (0) target = $region73
    $region72: #{tpu_custom_call.1} parent=1 // pred_region
      _
    $region73: #{tpu_custom_call.1} parent=1 // pred_fallthru
      _
    // Predicated region
    $region74: #{tpu_custom_call.1} parent=1 // pred_check
      _
    $region75: #{tpu_custom_call.1} parent=1 // pred_check_branch
      %2052 = sbr.rel (0) target = $region77
    $region76: #{tpu_custom_call.1} parent=1 // pred_region
      %2054 = dma.done [#allocation4], 256
    $region77: #{tpu_custom_call.1} parent=1 // pred_fallthru
      _
    // Predicated region
    $region78: #{tpu_custom_call.1} parent=1 // pred_check
      _
    $region79: #{tpu_custom_call.1} parent=1 // pred_check_branch
      %2056 = sbr.rel (0) target = $region81
    $region80: #{tpu_custom_call.1} parent=1 // pred_region
      _
    $region81: #{tpu_custom_call.1} parent=1 // pred_fallthru
      _
    %2057 = vsyncpa [#allocation3], 1
    %2058 = vsyncpa [#allocation6], 1
    %2059 = vsyncpa [#allocation9], 1
    %2060 = vsyncpa [#allocation4], 1

</llo_original>
